<compile_context>
chip_gen: v6e
topology: v6e:2x2x1
jax: 0.10.0
libtpu: 0.0.40
codegen_flags: <defaults>
</compile_context>

<pallas_src>
import functools

import jax
import jax.numpy as jnp
from jax.experimental import pallas as pl
from jax.experimental.pallas import tpu as pltpu

LANE = 128      # lane quantum (last dim)
SUBLANE = 16    # bf16-safe sublane quantum (second-to-last dim)


def _round_up(v: int, m: int) -> int:
    return ((v + m - 1) // m) * m


def _pad2(a, rows: int, cols: int):
    pr, pc = rows - a.shape[0], cols - a.shape[1]
    if pr == 0 and pc == 0:
        return a
    return jnp.pad(a, ((0, pr), (0, pc)))


def _largest_divisor_tile(total: int, cap: int, quantum: int) -> int:
    """Largest multiple of `quantum` that divides `total` and is <= min(cap, total).

    `total` is already a multiple of `quantum`, so `quantum` always works.
    (On v6e the largest divisor is usually a multiple of 256 anyway, matching the
    2x256^2 MXU; on v5e 128-multiples are native.)
    """
    best = quantum
    t = quantum
    limit = min(cap, total)
    while t <= limit:
        if total % t == 0:
            best = t
        t += quantum
    return best


def _pick_tile_with_pad(size: int, cap: int, quantum: int):
    """(tile, padded_size): tile (multiple of quantum, <= cap) minimizing padded size;
    ties broken toward the larger tile (fewer grid steps, fewer operand re-reads)."""
    size_q = _round_up(max(size, 1), quantum)
    if size_q <= cap:
        return size_q, size_q
    best_t, best_pad = quantum, _round_up(size_q, quantum)
    t = quantum
    while t <= cap:
        padded = _round_up(size_q, t)
        if padded < best_pad or (padded == best_pad and t > best_t):
            best_t, best_pad = t, padded
        t += quantum
    return best_t, best_pad


# ----------------------------------------------------------------------------
# Kernels
# ----------------------------------------------------------------------------
def _cat_linear_small_kernel(x_ref, wx_ref, h_ref, wh_ref, b_ref, o_ref):
    """Single-block fast path: whole operands resident in VMEM, no pipelining."""
    acc = jnp.dot(x_ref[...], wx_ref[...], preferred_element_type=jnp.float32)
    acc = acc + jnp.dot(h_ref[...], wh_ref[...], preferred_element_type=jnp.float32)
    o_ref[...] = (acc + b_ref[...].astype(jnp.float32)).astype(o_ref.dtype)


def _cat_linear_kernel(x_ref, wx_ref, h_ref, wh_ref, b_ref, o_ref, acc_ref, *, nkx):
    """Fused cat([x, h], -1) @ W + b, expressed as two accumulated MXU dots.

    Grid = (M tiles, N tiles, nkx + nkh). The first nkx K-steps contract over the
    x-half of the weight, the remaining K-steps over the h-half. Bias add and
    downcast happen exactly once, on the last K step.
    """
    k = pl.program_id(2)
    nk = pl.num_programs(2)

    @pl.when(k == 0)
    def _first():
        # Fold accumulator init into the first dot: saves a full tm*tn f32
        # zero-fill store + VPU add per output tile.
        acc_ref[...] = jnp.dot(
            x_ref[...], wx_ref[...], preferred_element_type=jnp.float32
        )

    @pl.when(jnp.logical_and(k > 0, k < nkx))
    def _x_half():
        acc_ref[...] += jnp.dot(
            x_ref[...], wx_ref[...], preferred_element_type=jnp.float32
        )

    @pl.when(k >= nkx)
    def _h_half():
        acc_ref[...] += jnp.dot(
            h_ref[...], wh_ref[...], preferred_element_type=jnp.float32
        )

    @pl.when(k == nk - 1)
    def _finalize():
        # Bias added once, in f32, then a single lane-dense store per tile.
        o_ref[...] = (acc_ref[...] + b_ref[...].astype(jnp.float32)).astype(o_ref.dtype)


# ----------------------------------------------------------------------------
# Wrapper
# ----------------------------------------------------------------------------
@functools.partial(jax.jit, static_argnames=("tm", "tn", "tk", "use_bf16"))
def cat_module_forward(x, h, w, b, *, tm=None, tn=None, tk=None, use_bf16=True):
    """x: (B, X), h: (B, H), w: (X+H, D), b: (D,) -> (B, D).

    Note: use_bf16=True (default) casts inputs/weights to bf16 with f32 MXU
    accumulation - a documented numerics contract vs. the f32 PyTorch reference.
    """
    B, X = x.shape
    Bh, H = h.shape
    K, D = w.shape
    assert Bh == B and K == X + H and b.shape == (D,)
    assert X > 0 and H > 0

    out_dtype = x.dtype
    in_dtype = jnp.bfloat16 if use_bf16 else x.dtype
    in_bytes = jnp.dtype(in_dtype).itemsize
    out_bytes = jnp.dtype(out_dtype).itemsize

    # Split the weight in the wrapper (free HBM slices) -> two MXU dots, no concat.
    w_x, w_h = w[:X], w[X:]

    def _prep(a):
        return a.astype(in_dtype) if a.dtype != in_dtype else a

    cx, ch, cwx, cwh = _prep(x), _prep(h), _prep(w_x), _prep(w_h)
    cb = b.astype(jnp.float32).reshape(1, D)

    # --- K axis: pad only to the lane quantum (128), then pick exact-divisor tiles
    #     (no over-padding -> no zero MXU passes, honest cost estimate).
    tk_cap = _round_up(max(tk, LANE), LANE) if tk is not None else 512
    Xp = _round_up(X, LANE)
    Hp = _round_up(H, LANE)
    tkx = _largest_divisor_tile(Xp, tk_cap, LANE)
    tkh = _largest_divisor_tile(Hp, tk_cap, LANE)

    # --- Small-problem fast path: everything VMEM-resident, single invocation.
    Bp16 = _round_up(B, SUBLANE)
    Dp128 = _round_up(D, LANE)
    resident_bytes = (
        (Bp16 * Xp + Bp16 * Hp + Xp * Dp128 + Hp * Dp128) * in_bytes
        + 8 * Dp128 * 4
        + Bp16 * Dp128 * (4 + out_bytes)
    )
    if tm is None and tn is None and tk is None and resident_bytes <= 12 * 1024 * 1024:
        cxp = _pad2(cx, Bp16, Xp)
        chp = _pad2(ch, Bp16, Hp)
        cwxp = _pad2(cwx, Xp, Dp128)
        cwhp = _pad2(cwh, Hp, Dp128)
        cbp = _pad2(cb, 1, Dp128)
        flops = 2 * Bp16 * (Xp + Hp) * Dp128
        bytes_accessed = (
            (cxp.size + chp.size + cwxp.size + cwhp.size) * in_bytes
            + cbp.size * 4
            + Bp16 * Dp128 * out_bytes
        )
        out_padded = pl.pallas_call(
            _cat_linear_small_kernel,
            out_shape=jax.ShapeDtypeStruct((Bp16, Dp128), out_dtype),
            in_specs=[pl.BlockSpec(memory_space=pltpu.MemorySpace.VMEM)] * 5,
            out_specs=pl.BlockSpec(memory_space=pltpu.MemorySpace.VMEM),
            compiler_params=pltpu.CompilerParams(
                vmem_limit_bytes=int(
                    min(48 * 1024 * 1024,
                        max(16 * 1024 * 1024, resident_bytes + 4 * 1024 * 1024))
                ),
                # Let the bf16 cast / zero-pad fuse into the pallas operands
                # instead of a separate HBM round trip.
                allow_input_fusion=[True] * 5,
            ),
            cost_estimate=pl.CostEstimate(
                flops=flops, transcendentals=0, bytes_accessed=bytes_accessed
            ),
        )(cxp, cwxp, chp, cwhp, cbp)
        if Bp16 == B and Dp128 == D:
            return out_padded
        return out_padded[:B, :D]

    # --- Tiled/pipelined path.
    # M/N tiles: scale up to 512 (HBM-bound op -> larger resident output tiles cut
    # weight/activation re-reads), minimize padding, round user tiles to quanta.
    if tm is not None:
        tm_v = _round_up(max(tm, SUBLANE), SUBLANE)
        Bp = _round_up(B, tm_v)
    else:
        tm_v, Bp = _pick_tile_with_pad(B, 512, SUBLANE)
    if tn is not None:
        tn_v = _round_up(max(tn, LANE), LANE)
        Dp = _round_up(D, tn_v)
    else:
        tn_v, Dp = _pick_tile_with_pad(D, 512, LANE)

    nm, nn = Bp // tm_v, Dp // tn_v
    # v7x has 2 TensorCores: make sure there are >= 2 parallel (M, N) grid points
    # when the defaults would collapse to a single tile.
    if tm is None and tn is None and nm * nn == 1:
        if Dp // LANE >= 2:
            tn_v = _largest_divisor_tile(Dp, Dp // 2, LANE)
        elif Bp // SUBLANE >= 2:
            tm_v = _largest_divisor_tile(Bp, Bp // 2, SUBLANE)
        nm, nn = Bp // tm_v, Dp // tn_v

    # Zero-pad so every block is (16,128)-aligned and every store is lane-dense.
    cx = _pad2(cx, Bp, Xp)
    ch = _pad2(ch, Bp, Hp)
    cwx = _pad2(cwx, Xp, Dp)
    cwh = _pad2(cwh, Hp, Dp)
    cb = _pad2(cb, 1, Dp)

    nkx, nkh = Xp // tkx, Hp // tkh
    nk = nkx + nkh

    # Index maps: clamp so no block index ever goes out of range; unchanged block
    # indices across consecutive K steps are not re-DMA'd by the pipeline.
    x_map = lambda i, j, k: (i, jnp.minimum(k, nkx - 1))
    wx_map = lambda i, j, k: (jnp.minimum(k, nkx - 1), j)
    h_map = lambda i, j, k: (i, jnp.maximum(k - nkx, 0))
    wh_map = lambda i, j, k: (jnp.maximum(k - nkx, 0), j)
    b_map = lambda i, j, k: (0, j)
    o_map = lambda i, j, k: (i, j)

    # Exact VMEM budget: double-buffered inputs + bias + f32 acc + double-buffered
    # output, plus a little headroom; capped at 48 MiB (safe on v7x's 64 MiB).
    vmem_needed = (
        2 * (tm_v * tkx + tm_v * tkh + tkx * tn_v + tkh * tn_v) * in_bytes
        + 2 * 8 * tn_v * 4
        + tm_v * tn_v * 4
        + 2 * tm_v * tn_v * out_bytes
    )
    vmem_limit = int(
        min(48 * 1024 * 1024, max(8 * 1024 * 1024, vmem_needed + 2 * 1024 * 1024))
    )

    flops = 2 * Bp * (Xp + Hp) * Dp
    bytes_accessed = (
        nn * (Bp * Xp + Bp * Hp) * in_bytes   # activations re-read per N tile
        + nm * (Xp * Dp + Hp * Dp) * in_bytes  # weights re-read per M tile
        + nm * Dp * 4
        + Bp * Dp * out_bytes
    )

    kernel = functools.partial(_cat_linear_kernel, nkx=nkx)

    out_padded = pl.pallas_call(
        kernel,
        out_shape=jax.ShapeDtypeStruct((Bp, Dp), out_dtype),
        grid_spec=pltpu.PrefetchScalarGridSpec(
            num_scalar_prefetch=0,
            grid=(nm, nn, nk),
            in_specs=[
                pl.BlockSpec((tm_v, tkx), x_map),
                pl.BlockSpec((tkx, tn_v), wx_map),
                pl.BlockSpec((tm_v, tkh), h_map),
                pl.BlockSpec((tkh, tn_v), wh_map),
                pl.BlockSpec((1, tn_v), b_map),
            ],
            out_specs=pl.BlockSpec((tm_v, tn_v), o_map),
            scratch_shapes=[pltpu.VMEM((tm_v, tn_v), jnp.float32)],
        ),
        compiler_params=pltpu.CompilerParams(
            dimension_semantics=("parallel", "parallel", "arbitrary"),
            vmem_limit_bytes=vmem_limit,
            allow_input_fusion=[True] * 5,
        ),
        cost_estimate=pl.CostEstimate(
            flops=flops, transcendentals=0, bytes_accessed=bytes_accessed
        ),
    )(cx, cwx, ch, cwh, cb)

    if Bp == B and Dp == D:
        return out_padded
    return out_padded[:B, :D]


if __name__ == "__main__":
    # Small shapes consistent with the module's (B, X)/(B, H) signature; X/H are
    # deliberately non-128-aligned to exercise the wrapper-side padding path.
    B, X, H, D = 128, 96, 160, 256

    key = jax.random.PRNGKey(0)
    kx, kh, kw, kb = jax.random.split(key, 4)

    x = jax.random.normal(kx, (B, X), dtype=jnp.float32)
    h = jax.random.normal(kh, (B, H), dtype=jnp.float32)
    # Deterministic parameters for the inner Linear(X+H -> D) module.
    w = jax.random.normal(kw, (X + H, D), dtype=jnp.float32) * 0.05
    b = jax.random.normal(kb, (D,), dtype=jnp.float32) * 0.05

    # 1) Small-problem fast path (single VMEM-resident block).
    out = jax.block_until_ready(cat_module_forward(x, h, w, b))
    ref = jnp.concatenate([x, h], axis=-1) @ w + b
    assert out.shape == (B, D)
    # bf16 inputs / f32 accumulation -> loose-but-tight-enough tolerance vs f32 ref.
    assert jnp.allclose(out, ref, atol=3e-2, rtol=3e-2), float(
        jnp.max(jnp.abs(out - ref))
    )

    # 2) Tiled/pipelined path (explicit tile sizes force the 3-D grid kernel).
    B2, X2, H2, D2 = 64, 200, 120, 384
    k2 = jax.random.split(kb, 4)
    x2 = jax.random.normal(k2[0], (B2, X2), dtype=jnp.float32)
    h2 = jax.random.normal(k2[1], (B2, H2), dtype=jnp.float32)
    w2 = jax.random.normal(k2[2], (X2 + H2, D2), dtype=jnp.float32) * 0.05
    b2 = jax.random.normal(k2[3], (D2,), dtype=jnp.float32) * 0.05
    out2 = jax.block_until_ready(
        cat_module_forward(x2, h2, w2, b2, tm=64, tn=128, tk=128)
    )
    ref2 = jnp.concatenate([x2, h2], axis=-1) @ w2 + b2
    assert out2.shape == (B2, D2)
    assert jnp.allclose(out2, ref2, atol=3e-2, rtol=3e-2), float(
        jnp.max(jnp.abs(out2 - ref2))
    )

    print("KERNEL_OK")
</pallas_src>

<mosaic_0001>
module attributes {stable_mosaic.version = 11 : i64} {
  func.func @_cat_linear_small_kernel(%arg0: memref<128x128xbf16, #tpu.memory_space<vmem>>, %arg1: memref<128x256xbf16, #tpu.memory_space<vmem>>, %arg2: memref<128x256xbf16, #tpu.memory_space<vmem>>, %arg3: memref<256x256xbf16, #tpu.memory_space<vmem>>, %arg4: memref<1x256xf32, #tpu.memory_space<vmem>>, %arg5: memref<128x256xf32, #tpu.memory_space<vmem>>) attributes {dimension_semantics = [], scalar_prefetch = 0 : i64, scratch_operands = 0 : i64, tpu.core_type = #tpu.core_type<tc>} {
    %c0 = arith.constant 0 : index
    %c0_0 = arith.constant 0 : index
    %0 = vector.load %arg0[%c0, %c0_0] : memref<128x128xbf16, #tpu.memory_space<vmem>>, vector<128x128xbf16>
    %c0_1 = arith.constant 0 : index
    %c0_2 = arith.constant 0 : index
    %1 = vector.load %arg1[%c0_1, %c0_2] : memref<128x256xbf16, #tpu.memory_space<vmem>>, vector<128x256xbf16>
    %cst = arith.constant dense<0.000000e+00> : vector<128x256xf32>
    %2 = tpu.matmul %0, %1, %cst {dimension_numbers = #tpu.dot_dimension_numbers<[1], [0], [0], [1], [0, 0, 1, 1], [], []>} : vector<128x128xbf16>, vector<128x256xbf16>, vector<128x256xf32> -> vector<128x256xf32>
    %c0_3 = arith.constant 0 : index
    %c0_4 = arith.constant 0 : index
    %3 = vector.load %arg2[%c0_3, %c0_4] : memref<128x256xbf16, #tpu.memory_space<vmem>>, vector<128x256xbf16>
    %c0_5 = arith.constant 0 : index
    %c0_6 = arith.constant 0 : index
    %4 = vector.load %arg3[%c0_5, %c0_6] : memref<256x256xbf16, #tpu.memory_space<vmem>>, vector<256x256xbf16>
    %cst_7 = arith.constant dense<0.000000e+00> : vector<128x256xf32>
    %5 = tpu.matmul %3, %4, %cst_7 {dimension_numbers = #tpu.dot_dimension_numbers<[1], [0], [0], [1], [0, 0, 1, 1], [], []>} : vector<128x256xbf16>, vector<256x256xbf16>, vector<128x256xf32> -> vector<128x256xf32>
    %6 = arith.addf %2, %5 : vector<128x256xf32>
    %c0_8 = arith.constant 0 : index
    %c0_9 = arith.constant 0 : index
    %7 = vector.load %arg4[%c0_8, %c0_9] : memref<1x256xf32, #tpu.memory_space<vmem>>, vector<1x256xf32>
    %8 = vector.broadcast %7 : vector<1x256xf32> to vector<128x256xf32>
    %9 = arith.addf %6, %8 : vector<128x256xf32>
    %c0_10 = arith.constant 0 : index
    %c0_11 = arith.constant 0 : index
    %10 = vector.load %arg5[%c0_10, %c0_11] : memref<128x256xf32, #tpu.memory_space<vmem>>, vector<128x256xf32>
    tpu.vector_store %arg5[%c0_10, %c0_11], %9 {strides = array<i32>} : memref<128x256xf32, #tpu.memory_space<vmem>>, vector<128x256xf32>,
    return
  }
}

</mosaic_0001>

<llo_original>
// kernel: cat_module_forward.2
$region0: #{cat_module_forward.2}
  #allocation0 [shape = 'u32[]', space=smem, size = 0x4, offset = 0x4, fixed_abs, tag = 'smem constant byte address 0x4 - core index']
  #allocation1 [shape = 'u32[144,128]{1,0:T(1,128)}', space=vmem, size = 0x12000, scoped, tag = 'internal scratch']
  #allocation2 [shape = 'u32[2048]{0}', space=vmem, size = 0x2000, scoped, tag = 'scoped memory for cat_module_forward.2']
  #allocation3 [shape = 'u32[2048]{0}', space=vmem, size = 0x2000, scoped, tag = 'scoped memory for cat_module_forward.2']
  #allocation4 [shape = 'u32[2048]{0}', space=vmem, size = 0x2000, scoped, tag = 'scoped memory for cat_module_forward.2']
  #allocation5 [shape = 'u32[2048]{0}', space=vmem, size = 0x2000, scoped, tag = 'scoped memory for cat_module_forward.2']
  #allocation6 [shape = 'u32[2048]{0}', space=vmem, size = 0x2000, scoped, tag = 'scoped memory for cat_module_forward.2']
  #allocation7 [shape = 'u32[2048]{0}', space=vmem, size = 0x2000, scoped, tag = 'scoped memory for cat_module_forward.2']
  #allocation8 [shape = 'u32[2048]{0}', space=vmem, size = 0x2000, scoped, tag = 'scoped memory for cat_module_forward.2']
  #allocation9 [shape = 'u32[2048]{0}', space=vmem, size = 0x2000, scoped, tag = 'scoped memory for cat_module_forward.2']
  #allocation10 [shape = 'u32[2048]{0}', space=vmem, size = 0x2000, scoped, tag = 'scoped memory for cat_module_forward.2']
  #allocation11 [shape = 'u32[2048]{0}', space=vmem, size = 0x2000, scoped, tag = 'scoped memory for cat_module_forward.2']
  #allocation12 [shape = 'u32[2048]{0}', space=vmem, size = 0x2000, scoped, tag = 'scoped memory for cat_module_forward.2']
  #allocation13 [shape = 'u32[2048]{0}', space=vmem, size = 0x2000, scoped, tag = 'scoped memory for cat_module_forward.2']
  #allocation14 [shape = 'u32[2048]{0}', space=vmem, size = 0x2000, scoped, tag = 'scoped memory for cat_module_forward.2']
  #allocation15 [shape = 'u32[2048]{0}', space=vmem, size = 0x2000, scoped, tag = 'scoped memory for cat_module_forward.2']
  #allocation16 [shape = 'u32[2048]{0}', space=vmem, size = 0x2000, scoped, tag = 'scoped memory for cat_module_forward.2']
  #allocation17 [shape = 'u32[2048]{0}', space=vmem, size = 0x2000, scoped, tag = 'scoped memory for cat_module_forward.2']
  #allocation18 [shape = 'u32[2048]{0}', space=vmem, size = 0x2000, scoped, tag = 'scoped memory for cat_module_forward.2']
  #allocation19 [shape = 'u32[2048]{0}', space=vmem, size = 0x2000, scoped, tag = 'scoped memory for cat_module_forward.2']
  #allocation20 [shape = 'u32[2048]{0}', space=vmem, size = 0x2000, scoped, tag = 'scoped memory for cat_module_forward.2']
  #allocation21 [shape = 'u32[2048]{0}', space=vmem, size = 0x2000, scoped, tag = 'scoped memory for cat_module_forward.2']
  %s0 = inlined_call_operand.vmem [shape: f32[1,256], index: 0, kind: input, shape index: {}]
  %s1 = inlined_call_operand.vmem [shape: bf16[160,256], index: 1, kind: input, shape index: {}]
  %s2 = inlined_call_operand.<no memory space> [shape: bf16[], index: 2, kind: input, shape index: {}]
  %s3 = inlined_call_operand.vmem [shape: bf16[256,256], index: 3, kind: input, shape index: {}]
  %s4 = inlined_call_operand.vmem [shape: bf16[128,160], index: 4, kind: input, shape index: {}]
  %s5 = inlined_call_operand.vmem [shape: pred[128], index: 5, kind: input, shape index: {}]
  %s6 = inlined_call_operand.vmem [shape: bf16[128,96], index: 6, kind: input, shape index: {}]
  %s7 = inlined_call_operand.hbm [shape: f32[128,256], index: 7, kind: output, shape index: {}]
  %s8 = sld [smem:[#allocation0]]
  $region34: #{cat_module_forward.2} parent=0
    _
  %s10 = ssub.s32 1, %s8
  %s11 = scalar_select 0, %s10, %s8
  %v12 = vstv %s2
  %v13 = vunpack.i.l.bf16 %v12
  %v15 = vunpack.i.h.bf16 %v12
  %v17 = vstv %s2
  %v18 = vunpack.i.l.bf16 %v17
  %v20 = vunpack.i.h.bf16 %v17
  %v22 = vstv %s2
  %v23 = vunpack.i.l.bf16 %v22
  %v25 = vunpack.i.h.bf16 %v22
  %v27 = vstv %s2
  %v28 = vunpack.i.l.bf16 %v27
  %v30 = vunpack.i.h.bf16 %v27
  $region1: #{cat_module_forward.2} parent=0
    #allocation22 [shape = 'u8[131072]{0}', space=vmem, size = 0x20000, scoped, tag = 'output window, operand 0, single buffered']
    #allocation23 [shape = 's32[1]{0}', space=sflag, size = 0x4, scoped, tag = 'scoped memory for cat_module_forward.2']
    #allocation24 [shape = 'u8[32768]{0}', space=vmem, size = 0x8000, dematerialized = true, scoped, tag = 'FusionAdapter Buffer %fusion.5 = bf16[128,128]{1,0:T(8,128)(2,1)} fusion(%param_6.4, %param_2.8), kind=kLoop, calls=%fused_computation.6.clone, metadata={op_name="jit(cat_module_forward)/jit(_pad)/pad" stack_frame_id=19}']
    #allocation25 [shape = 'u8[65536]{0}', space=vmem, size = 0x10000, dematerialized = true, scoped, tag = 'FusionAdapter Buffer %slice_select_fusion.1 = bf16[128,256]{1,0:T(8,128)(2,1)} fusion(%param_3.4, %param_5.5, %param_2.8), kind=kLoop, calls=%fused_computation.2.clone.clone, metadata={op_name="jit(cat_module_forward)/jit(_pad)/pad" stack_frame_id=23}']
    #allocation26 [shape = 'u8[65536]{0}', space=vmem, size = 0x10000, dematerialized = true, scoped, tag = 'FusionAdapter Buffer %fusion.2 = bf16[128,256]{1,0:T(8,128)(2,1)} fusion(%param_4.6, %param_2.8), kind=kLoop, calls=%fused_computation.3.clone, metadata={op_name="jit(cat_module_forward)/jit(_pad)/pad" stack_frame_id=21}']
    #allocation27 [shape = 'u8[131072]{0}', space=vmem, size = 0x20000, dematerialized = true, scoped, tag = 'FusionAdapter Buffer %fusion.1 = bf16[256,256]{1,0:T(8,128)(2,1)} fusion(%param_1.10, %param_2.8), kind=kLoop, calls=%fused_computation.1.clone, metadata={op_name="jit(cat_module_forward)/jit(_pad)/pad" stack_frame_id=25}']
    %32 = vsyncpa [#allocation23], 0
    // Predicated region
    $region2: #{cat_module_forward.2} parent=1 // pred_check
      _
    $region3: #{cat_module_forward.2} parent=1 // pred_check_branch
      %34 = sbr.rel (0) target = $region5
    $region4: #{cat_module_forward.2} parent=1 // pred_region
      _
    $region5: #{cat_module_forward.2} parent=1 // pred_fallthru
      _
    // Predicated region
    $region6: #{cat_module_forward.2} parent=1 // pred_check
      _
    $region7: #{cat_module_forward.2} parent=1 // pred_check_branch
      %36 = sbr.rel (0) target = $region9
    $region8: #{cat_module_forward.2} parent=1 // pred_region
      _
    $region9: #{cat_module_forward.2} parent=1 // pred_fallthru
      _
    // Predicated region
    $region10: #{cat_module_forward.2} parent=1 // pred_check
      _
    $region11: #{cat_module_forward.2} parent=1 // pred_check_branch
      %38 = sbr.rel (0) target = $region13
    $region12: #{cat_module_forward.2} parent=1 // pred_region
      _
    $region13: #{cat_module_forward.2} parent=1 // pred_fallthru
      _
    // Predicated region
    $region14: #{cat_module_forward.2} parent=1 // pred_check
      _
    $region15: #{cat_module_forward.2} parent=1 // pred_check_branch
      %40 = sbr.rel (0) target = $region17
    $region16: #{cat_module_forward.2} parent=1 // pred_region
      _
    $region17: #{cat_module_forward.2} parent=1 // pred_fallthru
      _
    // Predicated region
    $region18: #{cat_module_forward.2} parent=1 // pred_check
      _
    $region19: #{cat_module_forward.2} parent=1 // pred_check_branch
      %42 = sbr.rel (0) target = $region21
    $region20: #{cat_module_forward.2} parent=1 // pred_region
      _
    $region21: #{cat_module_forward.2} parent=1 // pred_fallthru
      _
    // Predicated region
    $region22: #{cat_module_forward.2} parent=1 // pred_check
      _
    $region23: #{cat_module_forward.2} parent=1 // pred_check_branch
      %44 = sbr.rel (0) target = $region25
    $region24: #{cat_module_forward.2} parent=1 // pred_region
      _
    $region25: #{cat_module_forward.2} parent=1 // pred_fallthru
      _
    %s46 = sor.u32 255, 127
    %s47 = sand.u32 %s46, 85
    %s48 = sshrl.u32 %s47, 1
    %s49 = sor.u32 %s47, %s48
    %s50 = sand.u32 51, %s49
    %s51 = sshrl.u32 %s50, 2
    %s52 = sor.u32 %s50, %s51
    %s53 = sand.u32 15, %s52
    %v54 = vld [vmem:[%s6] sm:%s53]
    %v55 = vunpack.c.l.bf16 %v54
    %v56 = vunpack.c.h.bf16 %v54
    %v57 = vlaneseq
    %v58 = vand.u32 %v57, 127
    %vm60 = vcmp.lt.s32.totalorder %v58, 96
    %v61 = vsel %vm60, %v55, %v13
    %v62 = vpack.c.bf16 0.0, %v61
    %s64 = ssub.s32 16, 1
    %65 = vst [vmem:[#allocation24] sm:%s64] %v62
    %s66 = scalar_lea.vmem %s6, 4
    %s68 = sor.u32 255, 127
    %s69 = sand.u32 %s68, 85
    %s70 = sshrl.u32 %s69, 1
    %s71 = sor.u32 %s69, %s70
    %s72 = sand.u32 51, %s71
    %s73 = sshrl.u32 %s72, 2
    %s74 = sor.u32 %s72, %s73
    %s75 = sand.u32 15, %s74
    %v76 = vld [vmem:[%s66] sm:%s75]
    %v77 = vunpack.c.l.bf16 %v76
    %v78 = vunpack.c.h.bf16 %v76
    %v79 = vlaneseq
    %v80 = vand.u32 %v79, 127
    %vm82 = vcmp.lt.s32.totalorder %v80, 96
    %v83 = vsel %vm82, %v77, %v13
    %s84 = scalar_lea.vmem [#allocation24], 4
    %v85 = vpack.c.bf16 0.0, %v83
    %s87 = ssub.s32 16, 1
    %88 = vst [vmem:[%s84] sm:%s87] %v85
    %s89 = scalar_lea.vmem %s6, 8
    %s91 = sor.u32 255, 127
    %s92 = sand.u32 %s91, 85
    %s93 = sshrl.u32 %s92, 1
    %s94 = sor.u32 %s92, %s93
    %s95 = sand.u32 51, %s94
    %s96 = sshrl.u32 %s95, 2
    %s97 = sor.u32 %s95, %s96
    %s98 = sand.u32 15, %s97
    %v99 = vld [vmem:[%s89] sm:%s98]
    %v100 = vunpack.c.l.bf16 %v99
    %v101 = vunpack.c.h.bf16 %v99
    %v102 = vlaneseq
    %v103 = vand.u32 %v102, 127
    %vm105 = vcmp.lt.s32.totalorder %v103, 96
    %v106 = vsel %vm105, %v100, %v13
    %s107 = scalar_lea.vmem [#allocation24], 8
    %v108 = vpack.c.bf16 0.0, %v106
    %s110 = ssub.s32 16, 1
    %111 = vst [vmem:[%s107] sm:%s110] %v108
    %s112 = scalar_lea.vmem %s6, 12
    %s114 = sor.u32 255, 127
    %s115 = sand.u32 %s114, 85
    %s116 = sshrl.u32 %s115, 1
    %s117 = sor.u32 %s115, %s116
    %s118 = sand.u32 51, %s117
    %s119 = sshrl.u32 %s118, 2
    %s120 = sor.u32 %s118, %s119
    %s121 = sand.u32 15, %s120
    %v122 = vld [vmem:[%s112] sm:%s121]
    %v123 = vunpack.c.l.bf16 %v122
    %v124 = vunpack.c.h.bf16 %v122
    %v125 = vlaneseq
    %v126 = vand.u32 %v125, 127
    %vm128 = vcmp.lt.s32.totalorder %v126, 96
    %v129 = vsel %vm128, %v123, %v13
    %s130 = scalar_lea.vmem [#allocation24], 12
    %v131 = vpack.c.bf16 0.0, %v129
    %s133 = ssub.s32 16, 1
    %134 = vst [vmem:[%s130] sm:%s133] %v131
    %s135 = scalar_lea.vmem %s6, 16
    %s137 = sor.u32 255, 127
    %s138 = sand.u32 %s137, 85
    %s139 = sshrl.u32 %s138, 1
    %s140 = sor.u32 %s138, %s139
    %s141 = sand.u32 51, %s140
    %s142 = sshrl.u32 %s141, 2
    %s143 = sor.u32 %s141, %s142
    %s144 = sand.u32 15, %s143
    %v145 = vld [vmem:[%s135] sm:%s144]
    %v146 = vunpack.c.l.bf16 %v145
    %v147 = vunpack.c.h.bf16 %v145
    %v148 = vlaneseq
    %v149 = vand.u32 %v148, 127
    %vm151 = vcmp.lt.s32.totalorder %v149, 96
    %v152 = vsel %vm151, %v146, %v13
    %s153 = scalar_lea.vmem [#allocation24], 16
    %v154 = vpack.c.bf16 0.0, %v152
    %s156 = ssub.s32 16, 1
    %157 = vst [vmem:[%s153] sm:%s156] %v154
    %s158 = scalar_lea.vmem %s6, 20
    %s160 = sor.u32 255, 127
    %s161 = sand.u32 %s160, 85
    %s162 = sshrl.u32 %s161, 1
    %s163 = sor.u32 %s161, %s162
    %s164 = sand.u32 51, %s163
    %s165 = sshrl.u32 %s164, 2
    %s166 = sor.u32 %s164, %s165
    %s167 = sand.u32 15, %s166
    %v168 = vld [vmem:[%s158] sm:%s167]
    %v169 = vunpack.c.l.bf16 %v168
    %v170 = vunpack.c.h.bf16 %v168
    %v171 = vlaneseq
    %v172 = vand.u32 %v171, 127
    %vm174 = vcmp.lt.s32.totalorder %v172, 96
    %v175 = vsel %vm174, %v169, %v13
    %s176 = scalar_lea.vmem [#allocation24], 20
    %v177 = vpack.c.bf16 0.0, %v175
    %s179 = ssub.s32 16, 1
    %180 = vst [vmem:[%s176] sm:%s179] %v177
    %s181 = scalar_lea.vmem %s6, 24
    %s183 = sor.u32 255, 127
    %s184 = sand.u32 %s183, 85
    %s185 = sshrl.u32 %s184, 1
    %s186 = sor.u32 %s184, %s185
    %s187 = sand.u32 51, %s186
    %s188 = sshrl.u32 %s187, 2
    %s189 = sor.u32 %s187, %s188
    %s190 = sand.u32 15, %s189
    %v191 = vld [vmem:[%s181] sm:%s190]
    %v192 = vunpack.c.l.bf16 %v191
    %v193 = vunpack.c.h.bf16 %v191
    %v194 = vlaneseq
    %v195 = vand.u32 %v194, 127
    %vm197 = vcmp.lt.s32.totalorder %v195, 96
    %v198 = vsel %vm197, %v192, %v13
    %s199 = scalar_lea.vmem [#allocation24], 24
    %v200 = vpack.c.bf16 0.0, %v198
    %s202 = ssub.s32 16, 1
    %203 = vst [vmem:[%s199] sm:%s202] %v200
    %s204 = scalar_lea.vmem %s6, 28
    %s206 = sor.u32 255, 127
    %s207 = sand.u32 %s206, 85
    %s208 = sshrl.u32 %s207, 1
    %s209 = sor.u32 %s207, %s208
    %s210 = sand.u32 51, %s209
    %s211 = sshrl.u32 %s210, 2
    %s212 = sor.u32 %s210, %s211
    %s213 = sand.u32 15, %s212
    %v214 = vld [vmem:[%s204] sm:%s213]
    %v215 = vunpack.c.l.bf16 %v214
    %v216 = vunpack.c.h.bf16 %v214
    %v217 = vlaneseq
    %v218 = vand.u32 %v217, 127
    %vm220 = vcmp.lt.s32.totalorder %v218, 96
    %v221 = vsel %vm220, %v215, %v13
    %s222 = scalar_lea.vmem [#allocation24], 28
    %v223 = vpack.c.bf16 0.0, %v221
    %s225 = ssub.s32 16, 1
    %226 = vst [vmem:[%s222] sm:%s225] %v223
    %s227 = scalar_lea.vmem %s6, 32
    %s229 = sor.u32 255, 127
    %s230 = sand.u32 %s229, 85
    %s231 = sshrl.u32 %s230, 1
    %s232 = sor.u32 %s230, %s231
    %s233 = sand.u32 51, %s232
    %s234 = sshrl.u32 %s233, 2
    %s235 = sor.u32 %s233, %s234
    %s236 = sand.u32 15, %s235
    %v237 = vld [vmem:[%s227] sm:%s236]
    %v238 = vunpack.c.l.bf16 %v237
    %v239 = vunpack.c.h.bf16 %v237
    %v240 = vlaneseq
    %v241 = vand.u32 %v240, 127
    %vm243 = vcmp.lt.s32.totalorder %v241, 96
    %v244 = vsel %vm243, %v238, %v13
    %s245 = scalar_lea.vmem [#allocation24], 32
    %v246 = vpack.c.bf16 0.0, %v244
    %s248 = ssub.s32 16, 1
    %249 = vst [vmem:[%s245] sm:%s248] %v246
    %s250 = scalar_lea.vmem %s6, 36
    %s252 = sor.u32 255, 127
    %s253 = sand.u32 %s252, 85
    %s254 = sshrl.u32 %s253, 1
    %s255 = sor.u32 %s253, %s254
    %s256 = sand.u32 51, %s255
    %s257 = sshrl.u32 %s256, 2
    %s258 = sor.u32 %s256, %s257
    %s259 = sand.u32 15, %s258
    %v260 = vld [vmem:[%s250] sm:%s259]
    %v261 = vunpack.c.l.bf16 %v260
    %v262 = vunpack.c.h.bf16 %v260
    %v263 = vlaneseq
    %v264 = vand.u32 %v263, 127
    %vm266 = vcmp.lt.s32.totalorder %v264, 96
    %v267 = vsel %vm266, %v261, %v13
    %s268 = scalar_lea.vmem [#allocation24], 36
    %v269 = vpack.c.bf16 0.0, %v267
    %s271 = ssub.s32 16, 1
    %272 = vst [vmem:[%s268] sm:%s271] %v269
    %s273 = scalar_lea.vmem %s6, 40
    %s275 = sor.u32 255, 127
    %s276 = sand.u32 %s275, 85
    %s277 = sshrl.u32 %s276, 1
    %s278 = sor.u32 %s276, %s277
    %s279 = sand.u32 51, %s278
    %s280 = sshrl.u32 %s279, 2
    %s281 = sor.u32 %s279, %s280
    %s282 = sand.u32 15, %s281
    %v283 = vld [vmem:[%s273] sm:%s282]
    %v284 = vunpack.c.l.bf16 %v283
    %v285 = vunpack.c.h.bf16 %v283
    %v286 = vlaneseq
    %v287 = vand.u32 %v286, 127
    %vm289 = vcmp.lt.s32.totalorder %v287, 96
    %v290 = vsel %vm289, %v284, %v13
    %s291 = scalar_lea.vmem [#allocation24], 40
    %v292 = vpack.c.bf16 0.0, %v290
    %s294 = ssub.s32 16, 1
    %295 = vst [vmem:[%s291] sm:%s294] %v292
    %s296 = scalar_lea.vmem %s6, 44
    %s298 = sor.u32 255, 127
    %s299 = sand.u32 %s298, 85
    %s300 = sshrl.u32 %s299, 1
    %s301 = sor.u32 %s299, %s300
    %s302 = sand.u32 51, %s301
    %s303 = sshrl.u32 %s302, 2
    %s304 = sor.u32 %s302, %s303
    %s305 = sand.u32 15, %s304
    %v306 = vld [vmem:[%s296] sm:%s305]
    %v307 = vunpack.c.l.bf16 %v306
    %v308 = vunpack.c.h.bf16 %v306
    %v309 = vlaneseq
    %v310 = vand.u32 %v309, 127
    %vm312 = vcmp.lt.s32.totalorder %v310, 96
    %v313 = vsel %vm312, %v307, %v13
    %s314 = scalar_lea.vmem [#allocation24], 44
    %v315 = vpack.c.bf16 0.0, %v313
    %s317 = ssub.s32 16, 1
    %318 = vst [vmem:[%s314] sm:%s317] %v315
    %s319 = scalar_lea.vmem %s6, 48
    %s321 = sor.u32 255, 127
    %s322 = sand.u32 %s321, 85
    %s323 = sshrl.u32 %s322, 1
    %s324 = sor.u32 %s322, %s323
    %s325 = sand.u32 51, %s324
    %s326 = sshrl.u32 %s325, 2
    %s327 = sor.u32 %s325, %s326
    %s328 = sand.u32 15, %s327
    %v329 = vld [vmem:[%s319] sm:%s328]
    %v330 = vunpack.c.l.bf16 %v329
    %v331 = vunpack.c.h.bf16 %v329
    %v332 = vlaneseq
    %v333 = vand.u32 %v332, 127
    %vm335 = vcmp.lt.s32.totalorder %v333, 96
    %v336 = vsel %vm335, %v330, %v13
    %s337 = scalar_lea.vmem [#allocation24], 48
    %v338 = vpack.c.bf16 0.0, %v336
    %s340 = ssub.s32 16, 1
    %341 = vst [vmem:[%s337] sm:%s340] %v338
    %s342 = scalar_lea.vmem %s6, 52
    %s344 = sor.u32 255, 127
    %s345 = sand.u32 %s344, 85
    %s346 = sshrl.u32 %s345, 1
    %s347 = sor.u32 %s345, %s346
    %s348 = sand.u32 51, %s347
    %s349 = sshrl.u32 %s348, 2
    %s350 = sor.u32 %s348, %s349
    %s351 = sand.u32 15, %s350
    %v352 = vld [vmem:[%s342] sm:%s351]
    %v353 = vunpack.c.l.bf16 %v352
    %v354 = vunpack.c.h.bf16 %v352
    %v355 = vlaneseq
    %v356 = vand.u32 %v355, 127
    %vm358 = vcmp.lt.s32.totalorder %v356, 96
    %v359 = vsel %vm358, %v353, %v13
    %s360 = scalar_lea.vmem [#allocation24], 52
    %v361 = vpack.c.bf16 0.0, %v359
    %s363 = ssub.s32 16, 1
    %364 = vst [vmem:[%s360] sm:%s363] %v361
    %s365 = scalar_lea.vmem %s6, 56
    %s367 = sor.u32 255, 127
    %s368 = sand.u32 %s367, 85
    %s369 = sshrl.u32 %s368, 1
    %s370 = sor.u32 %s368, %s369
    %s371 = sand.u32 51, %s370
    %s372 = sshrl.u32 %s371, 2
    %s373 = sor.u32 %s371, %s372
    %s374 = sand.u32 15, %s373
    %v375 = vld [vmem:[%s365] sm:%s374]
    %v376 = vunpack.c.l.bf16 %v375
    %v377 = vunpack.c.h.bf16 %v375
    %v378 = vlaneseq
    %v379 = vand.u32 %v378, 127
    %vm381 = vcmp.lt.s32.totalorder %v379, 96
    %v382 = vsel %vm381, %v376, %v13
    %s383 = scalar_lea.vmem [#allocation24], 56
    %v384 = vpack.c.bf16 0.0, %v382
    %s386 = ssub.s32 16, 1
    %387 = vst [vmem:[%s383] sm:%s386] %v384
    %s388 = scalar_lea.vmem %s6, 60
    %s390 = sor.u32 255, 127
    %s391 = sand.u32 %s390, 85
    %s392 = sshrl.u32 %s391, 1
    %s393 = sor.u32 %s391, %s392
    %s394 = sand.u32 51, %s393
    %s395 = sshrl.u32 %s394, 2
    %s396 = sor.u32 %s394, %s395
    %s397 = sand.u32 15, %s396
    %v398 = vld [vmem:[%s388] sm:%s397]
    %v399 = vunpack.c.l.bf16 %v398
    %v400 = vunpack.c.h.bf16 %v398
    %v401 = vlaneseq
    %v402 = vand.u32 %v401, 127
    %vm404 = vcmp.lt.s32.totalorder %v402, 96
    %v405 = vsel %vm404, %v399, %v13
    %s406 = scalar_lea.vmem [#allocation24], 60
    %v407 = vpack.c.bf16 0.0, %v405
    %s409 = ssub.s32 16, 1
    %410 = vst [vmem:[%s406] sm:%s409] %v407
    %v411 = vld [vmem:[%s3] sm:$0xf]
    %v412 = vunpack.c.l.bf16 %v411
    %v413 = vunpack.c.h.bf16 %v411
    %v414 = vld [vmem:[%s5] ss:$0 sm:$0xff]
    %v416 = vshra.s32 %v414, 0
    %v417 = vand.u32 %v416, 255
    %419 = vbcast.lane.b32.xlu0 %v417, 256
    %v420 = vpop.permute.xlu0 %419
    %421 = xla_tuple %v420, %v412, %v18
    %422 = xla_tuple %421
    %vm423 = vcmp.ne.s32.totalorder %v420, 0
    %v424 = vsel %vm423, %v412, %v18
    %425 = xla_tuple %v424
    %v426 = vpack.c.bf16 0.0, %v424
    %s428 = ssub.s32 16, 1
    %429 = vst [vmem:[#allocation25] sm:%s428] %v426
    %s430 = scalar_lea.vmem %s3, 4
    %v431 = vld [vmem:[%s430] sm:$0xf]
    %v432 = vunpack.c.l.bf16 %v431
    %v433 = vunpack.c.h.bf16 %v431
    %434 = xla_tuple %v420, %v432, %v18
    %435 = xla_tuple %434
    %vm436 = vcmp.ne.s32.totalorder %v420, 0
    %v437 = vsel %vm436, %v432, %v18
    %438 = xla_tuple %v437
    %s439 = scalar_lea.vmem [#allocation25], 4
    %v440 = vpack.c.bf16 0.0, %v437
    %s442 = ssub.s32 16, 1
    %443 = vst [vmem:[%s439] sm:%s442] %v440
    %s444 = scalar_lea.vmem %s3, 8
    %v445 = vld [vmem:[%s444] sm:$0xf]
    %v446 = vunpack.c.l.bf16 %v445
    %v447 = vunpack.c.h.bf16 %v445
    %v448 = vld [vmem:[%s5] ss:$0 sm:$0xff]
    %v450 = vshra.s32 %v448, 0
    %v451 = vand.u32 %v450, 255
    %s453 = sor.u32 256, 8
    %454 = vbcast.lane.b32.xlu0 %v451, %s453
    %v455 = vpop.permute.xlu0 %454
    %456 = xla_tuple %v455, %v446, %v18
    %457 = xla_tuple %456
    %vm458 = vcmp.ne.s32.totalorder %v455, 0
    %v459 = vsel %vm458, %v446, %v18
    %460 = xla_tuple %v459
    %s461 = scalar_lea.vmem [#allocation25], 8
    %v462 = vpack.c.bf16 0.0, %v459
    %s464 = ssub.s32 16, 1
    %465 = vst [vmem:[%s461] sm:%s464] %v462
    %s466 = scalar_lea.vmem %s3, 12
    %v467 = vld [vmem:[%s466] sm:$0xf]
    %v468 = vunpack.c.l.bf16 %v467
    %v469 = vunpack.c.h.bf16 %v467
    %470 = xla_tuple %v455, %v468, %v18
    %471 = xla_tuple %470
    %vm472 = vcmp.ne.s32.totalorder %v455, 0
    %v473 = vsel %vm472, %v468, %v18
    %474 = xla_tuple %v473
    %s475 = scalar_lea.vmem [#allocation25], 12
    %v476 = vpack.c.bf16 0.0, %v473
    %s478 = ssub.s32 16, 1
    %479 = vst [vmem:[%s475] sm:%s478] %v476
    %s480 = scalar_lea.vmem %s3, 16
    %v481 = vld [vmem:[%s480] sm:$0xf]
    %v482 = vunpack.c.l.bf16 %v481
    %v483 = vunpack.c.h.bf16 %v481
    %v484 = vld [vmem:[%s5] ss:$0 sm:$0xff]
    %v486 = vshra.s32 %v484, 0
    %v487 = vand.u32 %v486, 255
    %s489 = sor.u32 256, 16
    %490 = vbcast.lane.b32.xlu0 %v487, %s489
    %v491 = vpop.permute.xlu0 %490
    %492 = xla_tuple %v491, %v482, %v18
    %493 = xla_tuple %492
    %vm494 = vcmp.ne.s32.totalorder %v491, 0
    %v495 = vsel %vm494, %v482, %v18
    %496 = xla_tuple %v495
    %s497 = scalar_lea.vmem [#allocation25], 16
    %v498 = vpack.c.bf16 0.0, %v495
    %s500 = ssub.s32 16, 1
    %501 = vst [vmem:[%s497] sm:%s500] %v498
    %s502 = scalar_lea.vmem %s3, 20
    %v503 = vld [vmem:[%s502] sm:$0xf]
    %v504 = vunpack.c.l.bf16 %v503
    %v505 = vunpack.c.h.bf16 %v503
    %506 = xla_tuple %v491, %v504, %v18
    %507 = xla_tuple %506
    %vm508 = vcmp.ne.s32.totalorder %v491, 0
    %v509 = vsel %vm508, %v504, %v18
    %510 = xla_tuple %v509
    %s511 = scalar_lea.vmem [#allocation25], 20
    %v512 = vpack.c.bf16 0.0, %v509
    %s514 = ssub.s32 16, 1
    %515 = vst [vmem:[%s511] sm:%s514] %v512
    %s516 = scalar_lea.vmem %s3, 24
    %v517 = vld [vmem:[%s516] sm:$0xf]
    %v518 = vunpack.c.l.bf16 %v517
    %v519 = vunpack.c.h.bf16 %v517
    %v520 = vld [vmem:[%s5] ss:$0 sm:$0xff]
    %v522 = vshra.s32 %v520, 0
    %v523 = vand.u32 %v522, 255
    %s525 = sor.u32 256, 24
    %526 = vbcast.lane.b32.xlu0 %v523, %s525
    %v527 = vpop.permute.xlu0 %526
    %528 = xla_tuple %v527, %v518, %v18
    %529 = xla_tuple %528
    %vm530 = vcmp.ne.s32.totalorder %v527, 0
    %v531 = vsel %vm530, %v518, %v18
    %532 = xla_tuple %v531
    %s533 = scalar_lea.vmem [#allocation25], 24
    %v534 = vpack.c.bf16 0.0, %v531
    %s536 = ssub.s32 16, 1
    %537 = vst [vmem:[%s533] sm:%s536] %v534
    %s538 = scalar_lea.vmem %s3, 28
    %v539 = vld [vmem:[%s538] sm:$0xf]
    %v540 = vunpack.c.l.bf16 %v539
    %v541 = vunpack.c.h.bf16 %v539
    %542 = xla_tuple %v527, %v540, %v18
    %543 = xla_tuple %542
    %vm544 = vcmp.ne.s32.totalorder %v527, 0
    %v545 = vsel %vm544, %v540, %v18
    %546 = xla_tuple %v545
    %s547 = scalar_lea.vmem [#allocation25], 28
    %v548 = vpack.c.bf16 0.0, %v545
    %s550 = ssub.s32 16, 1
    %551 = vst [vmem:[%s547] sm:%s550] %v548
    %s552 = scalar_lea.vmem %s3, 32
    %v553 = vld [vmem:[%s552] sm:$0xf]
    %v554 = vunpack.c.l.bf16 %v553
    %v555 = vunpack.c.h.bf16 %v553
    %v556 = vld [vmem:[%s5] ss:$0 sm:$0xff]
    %v558 = vshra.s32 %v556, 0
    %v559 = vand.u32 %v558, 255
    %s561 = sor.u32 256, 32
    %562 = vbcast.lane.b32.xlu0 %v559, %s561
    %v563 = vpop.permute.xlu0 %562
    %564 = xla_tuple %v563, %v554, %v18
    %565 = xla_tuple %564
    %vm566 = vcmp.ne.s32.totalorder %v563, 0
    %v567 = vsel %vm566, %v554, %v18
    %568 = xla_tuple %v567
    %s569 = scalar_lea.vmem [#allocation25], 32
    %v570 = vpack.c.bf16 0.0, %v567
    %s572 = ssub.s32 16, 1
    %573 = vst [vmem:[%s569] sm:%s572] %v570
    %s574 = scalar_lea.vmem %s3, 36
    %v575 = vld [vmem:[%s574] sm:$0xf]
    %v576 = vunpack.c.l.bf16 %v575
    %v577 = vunpack.c.h.bf16 %v575
    %578 = xla_tuple %v563, %v576, %v18
    %579 = xla_tuple %578
    %vm580 = vcmp.ne.s32.totalorder %v563, 0
    %v581 = vsel %vm580, %v576, %v18
    %582 = xla_tuple %v581
    %s583 = scalar_lea.vmem [#allocation25], 36
    %v584 = vpack.c.bf16 0.0, %v581
    %s586 = ssub.s32 16, 1
    %587 = vst [vmem:[%s583] sm:%s586] %v584
    %s588 = scalar_lea.vmem %s3, 40
    %v589 = vld [vmem:[%s588] sm:$0xf]
    %v590 = vunpack.c.l.bf16 %v589
    %v591 = vunpack.c.h.bf16 %v589
    %v592 = vld [vmem:[%s5] ss:$0 sm:$0xff]
    %v594 = vshra.s32 %v592, 0
    %v595 = vand.u32 %v594, 255
    %s597 = sor.u32 256, 40
    %598 = vbcast.lane.b32.xlu0 %v595, %s597
    %v599 = vpop.permute.xlu0 %598
    %600 = xla_tuple %v599, %v590, %v18
    %601 = xla_tuple %600
    %vm602 = vcmp.ne.s32.totalorder %v599, 0
    %v603 = vsel %vm602, %v590, %v18
    %604 = xla_tuple %v603
    %s605 = scalar_lea.vmem [#allocation25], 40
    %v606 = vpack.c.bf16 0.0, %v603
    %s608 = ssub.s32 16, 1
    %609 = vst [vmem:[%s605] sm:%s608] %v606
    %s610 = scalar_lea.vmem %s3, 44
    %v611 = vld [vmem:[%s610] sm:$0xf]
    %v612 = vunpack.c.l.bf16 %v611
    %v613 = vunpack.c.h.bf16 %v611
    %614 = xla_tuple %v599, %v612, %v18
    %615 = xla_tuple %614
    %vm616 = vcmp.ne.s32.totalorder %v599, 0
    %v617 = vsel %vm616, %v612, %v18
    %618 = xla_tuple %v617
    %s619 = scalar_lea.vmem [#allocation25], 44
    %v620 = vpack.c.bf16 0.0, %v617
    %s622 = ssub.s32 16, 1
    %623 = vst [vmem:[%s619] sm:%s622] %v620
    %s624 = scalar_lea.vmem %s3, 48
    %v625 = vld [vmem:[%s624] sm:$0xf]
    %v626 = vunpack.c.l.bf16 %v625
    %v627 = vunpack.c.h.bf16 %v625
    %v628 = vld [vmem:[%s5] ss:$0 sm:$0xff]
    %v630 = vshra.s32 %v628, 0
    %v631 = vand.u32 %v630, 255
    %s633 = sor.u32 256, 48
    %634 = vbcast.lane.b32.xlu0 %v631, %s633
    %v635 = vpop.permute.xlu0 %634
    %636 = xla_tuple %v635, %v626, %v18
    %637 = xla_tuple %636
    %vm638 = vcmp.ne.s32.totalorder %v635, 0
    %v639 = vsel %vm638, %v626, %v18
    %640 = xla_tuple %v639
    %s641 = scalar_lea.vmem [#allocation25], 48
    %v642 = vpack.c.bf16 0.0, %v639
    %s644 = ssub.s32 16, 1
    %645 = vst [vmem:[%s641] sm:%s644] %v642
    %s646 = scalar_lea.vmem %s3, 52
    %v647 = vld [vmem:[%s646] sm:$0xf]
    %v648 = vunpack.c.l.bf16 %v647
    %v649 = vunpack.c.h.bf16 %v647
    %650 = xla_tuple %v635, %v648, %v18
    %651 = xla_tuple %650
    %vm652 = vcmp.ne.s32.totalorder %v635, 0
    %v653 = vsel %vm652, %v648, %v18
    %654 = xla_tuple %v653
    %s655 = scalar_lea.vmem [#allocation25], 52
    %v656 = vpack.c.bf16 0.0, %v653
    %s658 = ssub.s32 16, 1
    %659 = vst [vmem:[%s655] sm:%s658] %v656
    %s660 = scalar_lea.vmem %s3, 56
    %v661 = vld [vmem:[%s660] sm:$0xf]
    %v662 = vunpack.c.l.bf16 %v661
    %v663 = vunpack.c.h.bf16 %v661
    %v664 = vld [vmem:[%s5] ss:$0 sm:$0xff]
    %v666 = vshra.s32 %v664, 0
    %v667 = vand.u32 %v666, 255
    %s669 = sor.u32 256, 56
    %670 = vbcast.lane.b32.xlu0 %v667, %s669
    %v671 = vpop.permute.xlu0 %670
    %672 = xla_tuple %v671, %v662, %v18
    %673 = xla_tuple %672
    %vm674 = vcmp.ne.s32.totalorder %v671, 0
    %v675 = vsel %vm674, %v662, %v18
    %676 = xla_tuple %v675
    %s677 = scalar_lea.vmem [#allocation25], 56
    %v678 = vpack.c.bf16 0.0, %v675
    %s680 = ssub.s32 16, 1
    %681 = vst [vmem:[%s677] sm:%s680] %v678
    %s682 = scalar_lea.vmem %s3, 60
    %v683 = vld [vmem:[%s682] sm:$0xf]
    %v684 = vunpack.c.l.bf16 %v683
    %v685 = vunpack.c.h.bf16 %v683
    %686 = xla_tuple %v671, %v684, %v18
    %687 = xla_tuple %686
    %vm688 = vcmp.ne.s32.totalorder %v671, 0
    %v689 = vsel %vm688, %v684, %v18
    %690 = xla_tuple %v689
    %s691 = scalar_lea.vmem [#allocation25], 60
    %v692 = vpack.c.bf16 0.0, %v689
    %s694 = ssub.s32 16, 1
    %695 = vst [vmem:[%s691] sm:%s694] %v692
    %s696 = scalar_lea.vmem %s3, 64
    %v697 = vld [vmem:[%s696] sm:$0xf]
    %v698 = vunpack.c.l.bf16 %v697
    %v699 = vunpack.c.h.bf16 %v697
    %v700 = vld [vmem:[%s5] ss:$0 sm:$0xff]
    %v702 = vshra.s32 %v700, 0
    %v703 = vand.u32 %v702, 255
    %s705 = sor.u32 256, 64
    %706 = vbcast.lane.b32.xlu0 %v703, %s705
    %v707 = vpop.permute.xlu0 %706
    %708 = xla_tuple %v707, %v698, %v18
    %709 = xla_tuple %708
    %vm710 = vcmp.ne.s32.totalorder %v707, 0
    %v711 = vsel %vm710, %v698, %v18
    %712 = xla_tuple %v711
    %s713 = scalar_lea.vmem [#allocation25], 64
    %v714 = vpack.c.bf16 0.0, %v711
    %s716 = ssub.s32 16, 1
    %717 = vst [vmem:[%s713] sm:%s716] %v714
    %s718 = scalar_lea.vmem %s3, 68
    %v719 = vld [vmem:[%s718] sm:$0xf]
    %v720 = vunpack.c.l.bf16 %v719
    %v721 = vunpack.c.h.bf16 %v719
    %722 = xla_tuple %v707, %v720, %v18
    %723 = xla_tuple %722
    %vm724 = vcmp.ne.s32.totalorder %v707, 0
    %v725 = vsel %vm724, %v720, %v18
    %726 = xla_tuple %v725
    %s727 = scalar_lea.vmem [#allocation25], 68
    %v728 = vpack.c.bf16 0.0, %v725
    %s730 = ssub.s32 16, 1
    %731 = vst [vmem:[%s727] sm:%s730] %v728
    %s732 = scalar_lea.vmem %s3, 72
    %v733 = vld [vmem:[%s732] sm:$0xf]
    %v734 = vunpack.c.l.bf16 %v733
    %v735 = vunpack.c.h.bf16 %v733
    %v736 = vld [vmem:[%s5] ss:$0 sm:$0xff]
    %v738 = vshra.s32 %v736, 0
    %v739 = vand.u32 %v738, 255
    %s741 = sor.u32 256, 72
    %742 = vbcast.lane.b32.xlu0 %v739, %s741
    %v743 = vpop.permute.xlu0 %742
    %744 = xla_tuple %v743, %v734, %v18
    %745 = xla_tuple %744
    %vm746 = vcmp.ne.s32.totalorder %v743, 0
    %v747 = vsel %vm746, %v734, %v18
    %748 = xla_tuple %v747
    %s749 = scalar_lea.vmem [#allocation25], 72
    %v750 = vpack.c.bf16 0.0, %v747
    %s752 = ssub.s32 16, 1
    %753 = vst [vmem:[%s749] sm:%s752] %v750
    %s754 = scalar_lea.vmem %s3, 76
    %v755 = vld [vmem:[%s754] sm:$0xf]
    %v756 = vunpack.c.l.bf16 %v755
    %v757 = vunpack.c.h.bf16 %v755
    %758 = xla_tuple %v743, %v756, %v18
    %759 = xla_tuple %758
    %vm760 = vcmp.ne.s32.totalorder %v743, 0
    %v761 = vsel %vm760, %v756, %v18
    %762 = xla_tuple %v761
    %s763 = scalar_lea.vmem [#allocation25], 76
    %v764 = vpack.c.bf16 0.0, %v761
    %s766 = ssub.s32 16, 1
    %767 = vst [vmem:[%s763] sm:%s766] %v764
    %s768 = scalar_lea.vmem %s3, 80
    %v769 = vld [vmem:[%s768] sm:$0xf]
    %v770 = vunpack.c.l.bf16 %v769
    %v771 = vunpack.c.h.bf16 %v769
    %v772 = vld [vmem:[%s5] ss:$0 sm:$0xff]
    %v774 = vshra.s32 %v772, 0
    %v775 = vand.u32 %v774, 255
    %s777 = sor.u32 256, 80
    %778 = vbcast.lane.b32.xlu0 %v775, %s777
    %v779 = vpop.permute.xlu0 %778
    %780 = xla_tuple %v779, %v770, %v18
    %781 = xla_tuple %780
    %vm782 = vcmp.ne.s32.totalorder %v779, 0
    %v783 = vsel %vm782, %v770, %v18
    %784 = xla_tuple %v783
    %s785 = scalar_lea.vmem [#allocation25], 80
    %v786 = vpack.c.bf16 0.0, %v783
    %s788 = ssub.s32 16, 1
    %789 = vst [vmem:[%s785] sm:%s788] %v786
    %s790 = scalar_lea.vmem %s3, 84
    %v791 = vld [vmem:[%s790] sm:$0xf]
    %v792 = vunpack.c.l.bf16 %v791
    %v793 = vunpack.c.h.bf16 %v791
    %794 = xla_tuple %v779, %v792, %v18
    %795 = xla_tuple %794
    %vm796 = vcmp.ne.s32.totalorder %v779, 0
    %v797 = vsel %vm796, %v792, %v18
    %798 = xla_tuple %v797
    %s799 = scalar_lea.vmem [#allocation25], 84
    %v800 = vpack.c.bf16 0.0, %v797
    %s802 = ssub.s32 16, 1
    %803 = vst [vmem:[%s799] sm:%s802] %v800
    %s804 = scalar_lea.vmem %s3, 88
    %v805 = vld [vmem:[%s804] sm:$0xf]
    %v806 = vunpack.c.l.bf16 %v805
    %v807 = vunpack.c.h.bf16 %v805
    %v808 = vld [vmem:[%s5] ss:$0 sm:$0xff]
    %v810 = vshra.s32 %v808, 0
    %v811 = vand.u32 %v810, 255
    %s813 = sor.u32 256, 88
    %814 = vbcast.lane.b32.xlu0 %v811, %s813
    %v815 = vpop.permute.xlu0 %814
    %816 = xla_tuple %v815, %v806, %v18
    %817 = xla_tuple %816
    %vm818 = vcmp.ne.s32.totalorder %v815, 0
    %v819 = vsel %vm818, %v806, %v18
    %820 = xla_tuple %v819
    %s821 = scalar_lea.vmem [#allocation25], 88
    %v822 = vpack.c.bf16 0.0, %v819
    %s824 = ssub.s32 16, 1
    %825 = vst [vmem:[%s821] sm:%s824] %v822
    %s826 = scalar_lea.vmem %s3, 92
    %v827 = vld [vmem:[%s826] sm:$0xf]
    %v828 = vunpack.c.l.bf16 %v827
    %v829 = vunpack.c.h.bf16 %v827
    %830 = xla_tuple %v815, %v828, %v18
    %831 = xla_tuple %830
    %vm832 = vcmp.ne.s32.totalorder %v815, 0
    %v833 = vsel %vm832, %v828, %v18
    %834 = xla_tuple %v833
    %s835 = scalar_lea.vmem [#allocation25], 92
    %v836 = vpack.c.bf16 0.0, %v833
    %s838 = ssub.s32 16, 1
    %839 = vst [vmem:[%s835] sm:%s838] %v836
    %s840 = scalar_lea.vmem %s3, 96
    %v841 = vld [vmem:[%s840] sm:$0xf]
    %v842 = vunpack.c.l.bf16 %v841
    %v843 = vunpack.c.h.bf16 %v841
    %v844 = vld [vmem:[%s5] ss:$0 sm:$0xff]
    %v846 = vshra.s32 %v844, 0
    %v847 = vand.u32 %v846, 255
    %s849 = sor.u32 256, 96
    %850 = vbcast.lane.b32.xlu0 %v847, %s849
    %v851 = vpop.permute.xlu0 %850
    %852 = xla_tuple %v851, %v842, %v18
    %853 = xla_tuple %852
    %vm854 = vcmp.ne.s32.totalorder %v851, 0
    %v855 = vsel %vm854, %v842, %v18
    %856 = xla_tuple %v855
    %s857 = scalar_lea.vmem [#allocation25], 96
    %v858 = vpack.c.bf16 0.0, %v855
    %s860 = ssub.s32 16, 1
    %861 = vst [vmem:[%s857] sm:%s860] %v858
    %s862 = scalar_lea.vmem %s3, 100
    %v863 = vld [vmem:[%s862] sm:$0xf]
    %v864 = vunpack.c.l.bf16 %v863
    %v865 = vunpack.c.h.bf16 %v863
    %866 = xla_tuple %v851, %v864, %v18
    %867 = xla_tuple %866
    %vm868 = vcmp.ne.s32.totalorder %v851, 0
    %v869 = vsel %vm868, %v864, %v18
    %870 = xla_tuple %v869
    %s871 = scalar_lea.vmem [#allocation25], 100
    %v872 = vpack.c.bf16 0.0, %v869
    %s874 = ssub.s32 16, 1
    %875 = vst [vmem:[%s871] sm:%s874] %v872
    %s876 = scalar_lea.vmem %s3, 104
    %v877 = vld [vmem:[%s876] sm:$0xf]
    %v878 = vunpack.c.l.bf16 %v877
    %v879 = vunpack.c.h.bf16 %v877
    %v880 = vld [vmem:[%s5] ss:$0 sm:$0xff]
    %v882 = vshra.s32 %v880, 0
    %v883 = vand.u32 %v882, 255
    %s885 = sor.u32 256, 104
    %886 = vbcast.lane.b32.xlu0 %v883, %s885
    %v887 = vpop.permute.xlu0 %886
    %888 = xla_tuple %v887, %v878, %v18
    %889 = xla_tuple %888
    %vm890 = vcmp.ne.s32.totalorder %v887, 0
    %v891 = vsel %vm890, %v878, %v18
    %892 = xla_tuple %v891
    %s893 = scalar_lea.vmem [#allocation25], 104
    %v894 = vpack.c.bf16 0.0, %v891
    %s896 = ssub.s32 16, 1
    %897 = vst [vmem:[%s893] sm:%s896] %v894
    %s898 = scalar_lea.vmem %s3, 108
    %v899 = vld [vmem:[%s898] sm:$0xf]
    %v900 = vunpack.c.l.bf16 %v899
    %v901 = vunpack.c.h.bf16 %v899
    %902 = xla_tuple %v887, %v900, %v18
    %903 = xla_tuple %902
    %vm904 = vcmp.ne.s32.totalorder %v887, 0
    %v905 = vsel %vm904, %v900, %v18
    %906 = xla_tuple %v905
    %s907 = scalar_lea.vmem [#allocation25], 108
    %v908 = vpack.c.bf16 0.0, %v905
    %s910 = ssub.s32 16, 1
    %911 = vst [vmem:[%s907] sm:%s910] %v908
    %s912 = scalar_lea.vmem %s3, 112
    %v913 = vld [vmem:[%s912] sm:$0xf]
    %v914 = vunpack.c.l.bf16 %v913
    %v915 = vunpack.c.h.bf16 %v913
    %v916 = vld [vmem:[%s5] ss:$0 sm:$0xff]
    %v918 = vshra.s32 %v916, 0
    %v919 = vand.u32 %v918, 255
    %s921 = sor.u32 256, 112
    %922 = vbcast.lane.b32.xlu0 %v919, %s921
    %v923 = vpop.permute.xlu0 %922
    %924 = xla_tuple %v923, %v914, %v18
    %925 = xla_tuple %924
    %vm926 = vcmp.ne.s32.totalorder %v923, 0
    %v927 = vsel %vm926, %v914, %v18
    %928 = xla_tuple %v927
    %s929 = scalar_lea.vmem [#allocation25], 112
    %v930 = vpack.c.bf16 0.0, %v927
    %s932 = ssub.s32 16, 1
    %933 = vst [vmem:[%s929] sm:%s932] %v930
    %s934 = scalar_lea.vmem %s3, 116
    %v935 = vld [vmem:[%s934] sm:$0xf]
    %v936 = vunpack.c.l.bf16 %v935
    %v937 = vunpack.c.h.bf16 %v935
    %938 = xla_tuple %v923, %v936, %v18
    %939 = xla_tuple %938
    %vm940 = vcmp.ne.s32.totalorder %v923, 0
    %v941 = vsel %vm940, %v936, %v18
    %942 = xla_tuple %v941
    %s943 = scalar_lea.vmem [#allocation25], 116
    %v944 = vpack.c.bf16 0.0, %v941
    %s946 = ssub.s32 16, 1
    %947 = vst [vmem:[%s943] sm:%s946] %v944
    %s948 = scalar_lea.vmem %s3, 120
    %v949 = vld [vmem:[%s948] sm:$0xf]
    %v950 = vunpack.c.l.bf16 %v949
    %v951 = vunpack.c.h.bf16 %v949
    %v952 = vld [vmem:[%s5] ss:$0 sm:$0xff]
    %v954 = vshra.s32 %v952, 0
    %v955 = vand.u32 %v954, 255
    %s957 = sor.u32 256, 120
    %958 = vbcast.lane.b32.xlu0 %v955, %s957
    %v959 = vpop.permute.xlu0 %958
    %960 = xla_tuple %v959, %v950, %v18
    %961 = xla_tuple %960
    %vm962 = vcmp.ne.s32.totalorder %v959, 0
    %v963 = vsel %vm962, %v950, %v18
    %964 = xla_tuple %v963
    %s965 = scalar_lea.vmem [#allocation25], 120
    %v966 = vpack.c.bf16 0.0, %v963
    %s968 = ssub.s32 16, 1
    %969 = vst [vmem:[%s965] sm:%s968] %v966
    %s970 = scalar_lea.vmem %s3, 124
    %v971 = vld [vmem:[%s970] sm:$0xf]
    %v972 = vunpack.c.l.bf16 %v971
    %v973 = vunpack.c.h.bf16 %v971
    %974 = xla_tuple %v959, %v972, %v18
    %975 = xla_tuple %974
    %vm976 = vcmp.ne.s32.totalorder %v959, 0
    %v977 = vsel %vm976, %v972, %v18
    %978 = xla_tuple %v977
    %s979 = scalar_lea.vmem [#allocation25], 124
    %v980 = vpack.c.bf16 0.0, %v977
    %s982 = ssub.s32 16, 1
    %983 = vst [vmem:[%s979] sm:%s982] %v980
    %v984 = vld [vmem:[%s4] sm:$0xf]
    %v985 = vunpack.c.l.bf16 %v984
    %v986 = vunpack.c.h.bf16 %v984
    %v987 = vlaneseq
    %v988 = vand.u32 %v987, 127
    %vm990 = vcmp.lt.s32.totalorder %v988, 160
    %v991 = vsel %vm990, %v985, %v23
    %v992 = vpack.c.bf16 0.0, %v991
    %s994 = ssub.s32 16, 1
    %995 = vst [vmem:[#allocation26] sm:%s994] %v992
    %s996 = scalar_lea.vmem %s4, 4
    %s998 = sor.u32 255, 127
    %s999 = sand.u32 %s998, 85
    %s1000 = sshrl.u32 %s999, 1
    %s1001 = sor.u32 %s999, %s1000
    %s1002 = sand.u32 51, %s1001
    %s1003 = sshrl.u32 %s1002, 2
    %s1004 = sor.u32 %s1002, %s1003
    %s1005 = sand.u32 15, %s1004
    %v1006 = vld [vmem:[%s996] sm:%s1005]
    %v1007 = vunpack.c.l.bf16 %v1006
    %v1008 = vunpack.c.h.bf16 %v1006
    %v1009 = vlaneseq
    %v1010 = vand.u32 %v1009, 127
    %v1011 = vadd.s32 %v1010, 128
    %vm1012 = vcmp.lt.s32.totalorder %v1011, 160
    %v1013 = vsel %vm1012, %v1007, %v23
    %s1014 = scalar_lea.vmem [#allocation26], 4
    %v1015 = vpack.c.bf16 0.0, %v1013
    %s1017 = ssub.s32 16, 1
    %1018 = vst [vmem:[%s1014] sm:%s1017] %v1015
    %s1019 = scalar_lea.vmem %s4, 8
    %v1020 = vld [vmem:[%s1019] sm:$0xf]
    %v1021 = vunpack.c.l.bf16 %v1020
    %v1022 = vunpack.c.h.bf16 %v1020
    %v1023 = vlaneseq
    %v1024 = vand.u32 %v1023, 127
    %vm1026 = vcmp.lt.s32.totalorder %v1024, 160
    %v1027 = vsel %vm1026, %v1021, %v23
    %s1028 = scalar_lea.vmem [#allocation26], 8
    %v1029 = vpack.c.bf16 0.0, %v1027
    %s1031 = ssub.s32 16, 1
    %1032 = vst [vmem:[%s1028] sm:%s1031] %v1029
    %s1033 = scalar_lea.vmem %s4, 12
    %s1035 = sor.u32 255, 127
    %s1036 = sand.u32 %s1035, 85
    %s1037 = sshrl.u32 %s1036, 1
    %s1038 = sor.u32 %s1036, %s1037
    %s1039 = sand.u32 51, %s1038
    %s1040 = sshrl.u32 %s1039, 2
    %s1041 = sor.u32 %s1039, %s1040
    %s1042 = sand.u32 15, %s1041
    %v1043 = vld [vmem:[%s1033] sm:%s1042]
    %v1044 = vunpack.c.l.bf16 %v1043
    %v1045 = vunpack.c.h.bf16 %v1043
    %v1046 = vlaneseq
    %v1047 = vand.u32 %v1046, 127
    %v1048 = vadd.s32 %v1047, 128
    %vm1049 = vcmp.lt.s32.totalorder %v1048, 160
    %v1050 = vsel %vm1049, %v1044, %v23
    %s1051 = scalar_lea.vmem [#allocation26], 12
    %v1052 = vpack.c.bf16 0.0, %v1050
    %s1054 = ssub.s32 16, 1
    %1055 = vst [vmem:[%s1051] sm:%s1054] %v1052
    %s1056 = scalar_lea.vmem %s4, 16
    %v1057 = vld [vmem:[%s1056] sm:$0xf]
    %v1058 = vunpack.c.l.bf16 %v1057
    %v1059 = vunpack.c.h.bf16 %v1057
    %v1060 = vlaneseq
    %v1061 = vand.u32 %v1060, 127
    %vm1063 = vcmp.lt.s32.totalorder %v1061, 160
    %v1064 = vsel %vm1063, %v1058, %v23
    %s1065 = scalar_lea.vmem [#allocation26], 16
    %v1066 = vpack.c.bf16 0.0, %v1064
    %s1068 = ssub.s32 16, 1
    %1069 = vst [vmem:[%s1065] sm:%s1068] %v1066
    %s1070 = scalar_lea.vmem %s4, 20
    %s1072 = sor.u32 255, 127
    %s1073 = sand.u32 %s1072, 85
    %s1074 = sshrl.u32 %s1073, 1
    %s1075 = sor.u32 %s1073, %s1074
    %s1076 = sand.u32 51, %s1075
    %s1077 = sshrl.u32 %s1076, 2
    %s1078 = sor.u32 %s1076, %s1077
    %s1079 = sand.u32 15, %s1078
    %v1080 = vld [vmem:[%s1070] sm:%s1079]
    %v1081 = vunpack.c.l.bf16 %v1080
    %v1082 = vunpack.c.h.bf16 %v1080
    %v1083 = vlaneseq
    %v1084 = vand.u32 %v1083, 127
    %v1085 = vadd.s32 %v1084, 128
    %vm1086 = vcmp.lt.s32.totalorder %v1085, 160
    %v1087 = vsel %vm1086, %v1081, %v23
    %s1088 = scalar_lea.vmem [#allocation26], 20
    %v1089 = vpack.c.bf16 0.0, %v1087
    %s1091 = ssub.s32 16, 1
    %1092 = vst [vmem:[%s1088] sm:%s1091] %v1089
    %s1093 = scalar_lea.vmem %s4, 24
    %v1094 = vld [vmem:[%s1093] sm:$0xf]
    %v1095 = vunpack.c.l.bf16 %v1094
    %v1096 = vunpack.c.h.bf16 %v1094
    %v1097 = vlaneseq
    %v1098 = vand.u32 %v1097, 127
    %vm1100 = vcmp.lt.s32.totalorder %v1098, 160
    %v1101 = vsel %vm1100, %v1095, %v23
    %s1102 = scalar_lea.vmem [#allocation26], 24
    %v1103 = vpack.c.bf16 0.0, %v1101
    %s1105 = ssub.s32 16, 1
    %1106 = vst [vmem:[%s1102] sm:%s1105] %v1103
    %s1107 = scalar_lea.vmem %s4, 28
    %s1109 = sor.u32 255, 127
    %s1110 = sand.u32 %s1109, 85
    %s1111 = sshrl.u32 %s1110, 1
    %s1112 = sor.u32 %s1110, %s1111
    %s1113 = sand.u32 51, %s1112
    %s1114 = sshrl.u32 %s1113, 2
    %s1115 = sor.u32 %s1113, %s1114
    %s1116 = sand.u32 15, %s1115
    %v1117 = vld [vmem:[%s1107] sm:%s1116]
    %v1118 = vunpack.c.l.bf16 %v1117
    %v1119 = vunpack.c.h.bf16 %v1117
    %v1120 = vlaneseq
    %v1121 = vand.u32 %v1120, 127
    %v1122 = vadd.s32 %v1121, 128
    %vm1123 = vcmp.lt.s32.totalorder %v1122, 160
    %v1124 = vsel %vm1123, %v1118, %v23
    %s1125 = scalar_lea.vmem [#allocation26], 28
    %v1126 = vpack.c.bf16 0.0, %v1124
    %s1128 = ssub.s32 16, 1
    %1129 = vst [vmem:[%s1125] sm:%s1128] %v1126
    %s1130 = scalar_lea.vmem %s4, 32
    %v1131 = vld [vmem:[%s1130] sm:$0xf]
    %v1132 = vunpack.c.l.bf16 %v1131
    %v1133 = vunpack.c.h.bf16 %v1131
    %v1134 = vlaneseq
    %v1135 = vand.u32 %v1134, 127
    %vm1137 = vcmp.lt.s32.totalorder %v1135, 160
    %v1138 = vsel %vm1137, %v1132, %v23
    %s1139 = scalar_lea.vmem [#allocation26], 32
    %v1140 = vpack.c.bf16 0.0, %v1138
    %s1142 = ssub.s32 16, 1
    %1143 = vst [vmem:[%s1139] sm:%s1142] %v1140
    %s1144 = scalar_lea.vmem %s4, 36
    %s1146 = sor.u32 255, 127
    %s1147 = sand.u32 %s1146, 85
    %s1148 = sshrl.u32 %s1147, 1
    %s1149 = sor.u32 %s1147, %s1148
    %s1150 = sand.u32 51, %s1149
    %s1151 = sshrl.u32 %s1150, 2
    %s1152 = sor.u32 %s1150, %s1151
    %s1153 = sand.u32 15, %s1152
    %v1154 = vld [vmem:[%s1144] sm:%s1153]
    %v1155 = vunpack.c.l.bf16 %v1154
    %v1156 = vunpack.c.h.bf16 %v1154
    %v1157 = vlaneseq
    %v1158 = vand.u32 %v1157, 127
    %v1159 = vadd.s32 %v1158, 128
    %vm1160 = vcmp.lt.s32.totalorder %v1159, 160
    %v1161 = vsel %vm1160, %v1155, %v23
    %s1162 = scalar_lea.vmem [#allocation26], 36
    %v1163 = vpack.c.bf16 0.0, %v1161
    %s1165 = ssub.s32 16, 1
    %1166 = vst [vmem:[%s1162] sm:%s1165] %v1163
    %s1167 = scalar_lea.vmem %s4, 40
    %v1168 = vld [vmem:[%s1167] sm:$0xf]
    %v1169 = vunpack.c.l.bf16 %v1168
    %v1170 = vunpack.c.h.bf16 %v1168
    %v1171 = vlaneseq
    %v1172 = vand.u32 %v1171, 127
    %vm1174 = vcmp.lt.s32.totalorder %v1172, 160
    %v1175 = vsel %vm1174, %v1169, %v23
    %s1176 = scalar_lea.vmem [#allocation26], 40
    %v1177 = vpack.c.bf16 0.0, %v1175
    %s1179 = ssub.s32 16, 1
    %1180 = vst [vmem:[%s1176] sm:%s1179] %v1177
    %s1181 = scalar_lea.vmem %s4, 44
    %s1183 = sor.u32 255, 127
    %s1184 = sand.u32 %s1183, 85
    %s1185 = sshrl.u32 %s1184, 1
    %s1186 = sor.u32 %s1184, %s1185
    %s1187 = sand.u32 51, %s1186
    %s1188 = sshrl.u32 %s1187, 2
    %s1189 = sor.u32 %s1187, %s1188
    %s1190 = sand.u32 15, %s1189
    %v1191 = vld [vmem:[%s1181] sm:%s1190]
    %v1192 = vunpack.c.l.bf16 %v1191
    %v1193 = vunpack.c.h.bf16 %v1191
    %v1194 = vlaneseq
    %v1195 = vand.u32 %v1194, 127
    %v1196 = vadd.s32 %v1195, 128
    %vm1197 = vcmp.lt.s32.totalorder %v1196, 160
    %v1198 = vsel %vm1197, %v1192, %v23
    %s1199 = scalar_lea.vmem [#allocation26], 44
    %v1200 = vpack.c.bf16 0.0, %v1198
    %s1202 = ssub.s32 16, 1
    %1203 = vst [vmem:[%s1199] sm:%s1202] %v1200
    %s1204 = scalar_lea.vmem %s4, 48
    %v1205 = vld [vmem:[%s1204] sm:$0xf]
    %v1206 = vunpack.c.l.bf16 %v1205
    %v1207 = vunpack.c.h.bf16 %v1205
    %v1208 = vlaneseq
    %v1209 = vand.u32 %v1208, 127
    %vm1211 = vcmp.lt.s32.totalorder %v1209, 160
    %v1212 = vsel %vm1211, %v1206, %v23
    %s1213 = scalar_lea.vmem [#allocation26], 48
    %v1214 = vpack.c.bf16 0.0, %v1212
    %s1216 = ssub.s32 16, 1
    %1217 = vst [vmem:[%s1213] sm:%s1216] %v1214
    %s1218 = scalar_lea.vmem %s4, 52
    %s1220 = sor.u32 255, 127
    %s1221 = sand.u32 %s1220, 85
    %s1222 = sshrl.u32 %s1221, 1
    %s1223 = sor.u32 %s1221, %s1222
    %s1224 = sand.u32 51, %s1223
    %s1225 = sshrl.u32 %s1224, 2
    %s1226 = sor.u32 %s1224, %s1225
    %s1227 = sand.u32 15, %s1226
    %v1228 = vld [vmem:[%s1218] sm:%s1227]
    %v1229 = vunpack.c.l.bf16 %v1228
    %v1230 = vunpack.c.h.bf16 %v1228
    %v1231 = vlaneseq
    %v1232 = vand.u32 %v1231, 127
    %v1233 = vadd.s32 %v1232, 128
    %vm1234 = vcmp.lt.s32.totalorder %v1233, 160
    %v1235 = vsel %vm1234, %v1229, %v23
    %s1236 = scalar_lea.vmem [#allocation26], 52
    %v1237 = vpack.c.bf16 0.0, %v1235
    %s1239 = ssub.s32 16, 1
    %1240 = vst [vmem:[%s1236] sm:%s1239] %v1237
    %s1241 = scalar_lea.vmem %s4, 56
    %v1242 = vld [vmem:[%s1241] sm:$0xf]
    %v1243 = vunpack.c.l.bf16 %v1242
    %v1244 = vunpack.c.h.bf16 %v1242
    %v1245 = vlaneseq
    %v1246 = vand.u32 %v1245, 127
    %vm1248 = vcmp.lt.s32.totalorder %v1246, 160
    %v1249 = vsel %vm1248, %v1243, %v23
    %s1250 = scalar_lea.vmem [#allocation26], 56
    %v1251 = vpack.c.bf16 0.0, %v1249
    %s1253 = ssub.s32 16, 1
    %1254 = vst [vmem:[%s1250] sm:%s1253] %v1251
    %s1255 = scalar_lea.vmem %s4, 60
    %s1257 = sor.u32 255, 127
    %s1258 = sand.u32 %s1257, 85
    %s1259 = sshrl.u32 %s1258, 1
    %s1260 = sor.u32 %s1258, %s1259
    %s1261 = sand.u32 51, %s1260
    %s1262 = sshrl.u32 %s1261, 2
    %s1263 = sor.u32 %s1261, %s1262
    %s1264 = sand.u32 15, %s1263
    %v1265 = vld [vmem:[%s1255] sm:%s1264]
    %v1266 = vunpack.c.l.bf16 %v1265
    %v1267 = vunpack.c.h.bf16 %v1265
    %v1268 = vlaneseq
    %v1269 = vand.u32 %v1268, 127
    %v1270 = vadd.s32 %v1269, 128
    %vm1271 = vcmp.lt.s32.totalorder %v1270, 160
    %v1272 = vsel %vm1271, %v1266, %v23
    %s1273 = scalar_lea.vmem [#allocation26], 60
    %v1274 = vpack.c.bf16 0.0, %v1272
    %s1276 = ssub.s32 16, 1
    %1277 = vst [vmem:[%s1273] sm:%s1276] %v1274
    %s1278 = scalar_lea.vmem %s4, 64
    %v1279 = vld [vmem:[%s1278] sm:$0xf]
    %v1280 = vunpack.c.l.bf16 %v1279
    %v1281 = vunpack.c.h.bf16 %v1279
    %v1282 = vlaneseq
    %v1283 = vand.u32 %v1282, 127
    %vm1285 = vcmp.lt.s32.totalorder %v1283, 160
    %v1286 = vsel %vm1285, %v1280, %v23
    %s1287 = scalar_lea.vmem [#allocation26], 64
    %v1288 = vpack.c.bf16 0.0, %v1286
    %s1290 = ssub.s32 16, 1
    %1291 = vst [vmem:[%s1287] sm:%s1290] %v1288
    %s1292 = scalar_lea.vmem %s4, 68
    %s1294 = sor.u32 255, 127
    %s1295 = sand.u32 %s1294, 85
    %s1296 = sshrl.u32 %s1295, 1
    %s1297 = sor.u32 %s1295, %s1296
    %s1298 = sand.u32 51, %s1297
    %s1299 = sshrl.u32 %s1298, 2
    %s1300 = sor.u32 %s1298, %s1299
    %s1301 = sand.u32 15, %s1300
    %v1302 = vld [vmem:[%s1292] sm:%s1301]
    %v1303 = vunpack.c.l.bf16 %v1302
    %v1304 = vunpack.c.h.bf16 %v1302
    %v1305 = vlaneseq
    %v1306 = vand.u32 %v1305, 127
    %v1307 = vadd.s32 %v1306, 128
    %vm1308 = vcmp.lt.s32.totalorder %v1307, 160
    %v1309 = vsel %vm1308, %v1303, %v23
    %s1310 = scalar_lea.vmem [#allocation26], 68
    %v1311 = vpack.c.bf16 0.0, %v1309
    %s1313 = ssub.s32 16, 1
    %1314 = vst [vmem:[%s1310] sm:%s1313] %v1311
    %s1315 = scalar_lea.vmem %s4, 72
    %v1316 = vld [vmem:[%s1315] sm:$0xf]
    %v1317 = vunpack.c.l.bf16 %v1316
    %v1318 = vunpack.c.h.bf16 %v1316
    %v1319 = vlaneseq
    %v1320 = vand.u32 %v1319, 127
    %vm1322 = vcmp.lt.s32.totalorder %v1320, 160
    %v1323 = vsel %vm1322, %v1317, %v23
    %s1324 = scalar_lea.vmem [#allocation26], 72
    %v1325 = vpack.c.bf16 0.0, %v1323
    %s1327 = ssub.s32 16, 1
    %1328 = vst [vmem:[%s1324] sm:%s1327] %v1325
    %s1329 = scalar_lea.vmem %s4, 76
    %s1331 = sor.u32 255, 127
    %s1332 = sand.u32 %s1331, 85
    %s1333 = sshrl.u32 %s1332, 1
    %s1334 = sor.u32 %s1332, %s1333
    %s1335 = sand.u32 51, %s1334
    %s1336 = sshrl.u32 %s1335, 2
    %s1337 = sor.u32 %s1335, %s1336
    %s1338 = sand.u32 15, %s1337
    %v1339 = vld [vmem:[%s1329] sm:%s1338]
    %v1340 = vunpack.c.l.bf16 %v1339
    %v1341 = vunpack.c.h.bf16 %v1339
    %v1342 = vlaneseq
    %v1343 = vand.u32 %v1342, 127
    %v1344 = vadd.s32 %v1343, 128
    %vm1345 = vcmp.lt.s32.totalorder %v1344, 160
    %v1346 = vsel %vm1345, %v1340, %v23
    %s1347 = scalar_lea.vmem [#allocation26], 76
    %v1348 = vpack.c.bf16 0.0, %v1346
    %s1350 = ssub.s32 16, 1
    %1351 = vst [vmem:[%s1347] sm:%s1350] %v1348
    %s1352 = scalar_lea.vmem %s4, 80
    %v1353 = vld [vmem:[%s1352] sm:$0xf]
    %v1354 = vunpack.c.l.bf16 %v1353
    %v1355 = vunpack.c.h.bf16 %v1353
    %v1356 = vlaneseq
    %v1357 = vand.u32 %v1356, 127
    %vm1359 = vcmp.lt.s32.totalorder %v1357, 160
    %v1360 = vsel %vm1359, %v1354, %v23
    %s1361 = scalar_lea.vmem [#allocation26], 80
    %v1362 = vpack.c.bf16 0.0, %v1360
    %s1364 = ssub.s32 16, 1
    %1365 = vst [vmem:[%s1361] sm:%s1364] %v1362
    %s1366 = scalar_lea.vmem %s4, 84
    %s1368 = sor.u32 255, 127
    %s1369 = sand.u32 %s1368, 85
    %s1370 = sshrl.u32 %s1369, 1
    %s1371 = sor.u32 %s1369, %s1370
    %s1372 = sand.u32 51, %s1371
    %s1373 = sshrl.u32 %s1372, 2
    %s1374 = sor.u32 %s1372, %s1373
    %s1375 = sand.u32 15, %s1374
    %v1376 = vld [vmem:[%s1366] sm:%s1375]
    %v1377 = vunpack.c.l.bf16 %v1376
    %v1378 = vunpack.c.h.bf16 %v1376
    %v1379 = vlaneseq
    %v1380 = vand.u32 %v1379, 127
    %v1381 = vadd.s32 %v1380, 128
    %vm1382 = vcmp.lt.s32.totalorder %v1381, 160
    %v1383 = vsel %vm1382, %v1377, %v23
    %s1384 = scalar_lea.vmem [#allocation26], 84
    %v1385 = vpack.c.bf16 0.0, %v1383
    %s1387 = ssub.s32 16, 1
    %1388 = vst [vmem:[%s1384] sm:%s1387] %v1385
    %s1389 = scalar_lea.vmem %s4, 88
    %v1390 = vld [vmem:[%s1389] sm:$0xf]
    %v1391 = vunpack.c.l.bf16 %v1390
    %v1392 = vunpack.c.h.bf16 %v1390
    %v1393 = vlaneseq
    %v1394 = vand.u32 %v1393, 127
    %vm1396 = vcmp.lt.s32.totalorder %v1394, 160
    %v1397 = vsel %vm1396, %v1391, %v23
    %s1398 = scalar_lea.vmem [#allocation26], 88
    %v1399 = vpack.c.bf16 0.0, %v1397
    %s1401 = ssub.s32 16, 1
    %1402 = vst [vmem:[%s1398] sm:%s1401] %v1399
    %s1403 = scalar_lea.vmem %s4, 92
    %s1405 = sor.u32 255, 127
    %s1406 = sand.u32 %s1405, 85
    %s1407 = sshrl.u32 %s1406, 1
    %s1408 = sor.u32 %s1406, %s1407
    %s1409 = sand.u32 51, %s1408
    %s1410 = sshrl.u32 %s1409, 2
    %s1411 = sor.u32 %s1409, %s1410
    %s1412 = sand.u32 15, %s1411
    %v1413 = vld [vmem:[%s1403] sm:%s1412]
    %v1414 = vunpack.c.l.bf16 %v1413
    %v1415 = vunpack.c.h.bf16 %v1413
    %v1416 = vlaneseq
    %v1417 = vand.u32 %v1416, 127
    %v1418 = vadd.s32 %v1417, 128
    %vm1419 = vcmp.lt.s32.totalorder %v1418, 160
    %v1420 = vsel %vm1419, %v1414, %v23
    %s1421 = scalar_lea.vmem [#allocation26], 92
    %v1422 = vpack.c.bf16 0.0, %v1420
    %s1424 = ssub.s32 16, 1
    %1425 = vst [vmem:[%s1421] sm:%s1424] %v1422
    %s1426 = scalar_lea.vmem %s4, 96
    %v1427 = vld [vmem:[%s1426] sm:$0xf]
    %v1428 = vunpack.c.l.bf16 %v1427
    %v1429 = vunpack.c.h.bf16 %v1427
    %v1430 = vlaneseq
    %v1431 = vand.u32 %v1430, 127
    %vm1433 = vcmp.lt.s32.totalorder %v1431, 160
    %v1434 = vsel %vm1433, %v1428, %v23
    %s1435 = scalar_lea.vmem [#allocation26], 96
    %v1436 = vpack.c.bf16 0.0, %v1434
    %s1438 = ssub.s32 16, 1
    %1439 = vst [vmem:[%s1435] sm:%s1438] %v1436
    %s1440 = scalar_lea.vmem %s4, 100
    %s1442 = sor.u32 255, 127
    %s1443 = sand.u32 %s1442, 85
    %s1444 = sshrl.u32 %s1443, 1
    %s1445 = sor.u32 %s1443, %s1444
    %s1446 = sand.u32 51, %s1445
    %s1447 = sshrl.u32 %s1446, 2
    %s1448 = sor.u32 %s1446, %s1447
    %s1449 = sand.u32 15, %s1448
    %v1450 = vld [vmem:[%s1440] sm:%s1449]
    %v1451 = vunpack.c.l.bf16 %v1450
    %v1452 = vunpack.c.h.bf16 %v1450
    %v1453 = vlaneseq
    %v1454 = vand.u32 %v1453, 127
    %v1455 = vadd.s32 %v1454, 128
    %vm1456 = vcmp.lt.s32.totalorder %v1455, 160
    %v1457 = vsel %vm1456, %v1451, %v23
    %s1458 = scalar_lea.vmem [#allocation26], 100
    %v1459 = vpack.c.bf16 0.0, %v1457
    %s1461 = ssub.s32 16, 1
    %1462 = vst [vmem:[%s1458] sm:%s1461] %v1459
    %s1463 = scalar_lea.vmem %s4, 104
    %v1464 = vld [vmem:[%s1463] sm:$0xf]
    %v1465 = vunpack.c.l.bf16 %v1464
    %v1466 = vunpack.c.h.bf16 %v1464
    %v1467 = vlaneseq
    %v1468 = vand.u32 %v1467, 127
    %vm1470 = vcmp.lt.s32.totalorder %v1468, 160
    %v1471 = vsel %vm1470, %v1465, %v23
    %s1472 = scalar_lea.vmem [#allocation26], 104
    %v1473 = vpack.c.bf16 0.0, %v1471
    %s1475 = ssub.s32 16, 1
    %1476 = vst [vmem:[%s1472] sm:%s1475] %v1473
    %s1477 = scalar_lea.vmem %s4, 108
    %s1479 = sor.u32 255, 127
    %s1480 = sand.u32 %s1479, 85
    %s1481 = sshrl.u32 %s1480, 1
    %s1482 = sor.u32 %s1480, %s1481
    %s1483 = sand.u32 51, %s1482
    %s1484 = sshrl.u32 %s1483, 2
    %s1485 = sor.u32 %s1483, %s1484
    %s1486 = sand.u32 15, %s1485
    %v1487 = vld [vmem:[%s1477] sm:%s1486]
    %v1488 = vunpack.c.l.bf16 %v1487
    %v1489 = vunpack.c.h.bf16 %v1487
    %v1490 = vlaneseq
    %v1491 = vand.u32 %v1490, 127
    %v1492 = vadd.s32 %v1491, 128
    %vm1493 = vcmp.lt.s32.totalorder %v1492, 160
    %v1494 = vsel %vm1493, %v1488, %v23
    %s1495 = scalar_lea.vmem [#allocation26], 108
    %v1496 = vpack.c.bf16 0.0, %v1494
    %s1498 = ssub.s32 16, 1
    %1499 = vst [vmem:[%s1495] sm:%s1498] %v1496
    %s1500 = scalar_lea.vmem %s4, 112
    %v1501 = vld [vmem:[%s1500] sm:$0xf]
    %v1502 = vunpack.c.l.bf16 %v1501
    %v1503 = vunpack.c.h.bf16 %v1501
    %v1504 = vlaneseq
    %v1505 = vand.u32 %v1504, 127
    %vm1507 = vcmp.lt.s32.totalorder %v1505, 160
    %v1508 = vsel %vm1507, %v1502, %v23
    %s1509 = scalar_lea.vmem [#allocation26], 112
    %v1510 = vpack.c.bf16 0.0, %v1508
    %s1512 = ssub.s32 16, 1
    %1513 = vst [vmem:[%s1509] sm:%s1512] %v1510
    %s1514 = scalar_lea.vmem %s4, 116
    %s1516 = sor.u32 255, 127
    %s1517 = sand.u32 %s1516, 85
    %s1518 = sshrl.u32 %s1517, 1
    %s1519 = sor.u32 %s1517, %s1518
    %s1520 = sand.u32 51, %s1519
    %s1521 = sshrl.u32 %s1520, 2
    %s1522 = sor.u32 %s1520, %s1521
    %s1523 = sand.u32 15, %s1522
    %v1524 = vld [vmem:[%s1514] sm:%s1523]
    %v1525 = vunpack.c.l.bf16 %v1524
    %v1526 = vunpack.c.h.bf16 %v1524
    %v1527 = vlaneseq
    %v1528 = vand.u32 %v1527, 127
    %v1529 = vadd.s32 %v1528, 128
    %vm1530 = vcmp.lt.s32.totalorder %v1529, 160
    %v1531 = vsel %vm1530, %v1525, %v23
    %s1532 = scalar_lea.vmem [#allocation26], 116
    %v1533 = vpack.c.bf16 0.0, %v1531
    %s1535 = ssub.s32 16, 1
    %1536 = vst [vmem:[%s1532] sm:%s1535] %v1533
    %s1537 = scalar_lea.vmem %s4, 120
    %v1538 = vld [vmem:[%s1537] sm:$0xf]
    %v1539 = vunpack.c.l.bf16 %v1538
    %v1540 = vunpack.c.h.bf16 %v1538
    %v1541 = vlaneseq
    %v1542 = vand.u32 %v1541, 127
    %vm1544 = vcmp.lt.s32.totalorder %v1542, 160
    %v1545 = vsel %vm1544, %v1539, %v23
    %s1546 = scalar_lea.vmem [#allocation26], 120
    %v1547 = vpack.c.bf16 0.0, %v1545
    %s1549 = ssub.s32 16, 1
    %1550 = vst [vmem:[%s1546] sm:%s1549] %v1547
    %s1551 = scalar_lea.vmem %s4, 124
    %s1553 = sor.u32 255, 127
    %s1554 = sand.u32 %s1553, 85
    %s1555 = sshrl.u32 %s1554, 1
    %s1556 = sor.u32 %s1554, %s1555
    %s1557 = sand.u32 51, %s1556
    %s1558 = sshrl.u32 %s1557, 2
    %s1559 = sor.u32 %s1557, %s1558
    %s1560 = sand.u32 15, %s1559
    %v1561 = vld [vmem:[%s1551] sm:%s1560]
    %v1562 = vunpack.c.l.bf16 %v1561
    %v1563 = vunpack.c.h.bf16 %v1561
    %v1564 = vlaneseq
    %v1565 = vand.u32 %v1564, 127
    %v1566 = vadd.s32 %v1565, 128
    %vm1567 = vcmp.lt.s32.totalorder %v1566, 160
    %v1568 = vsel %vm1567, %v1562, %v23
    %s1569 = scalar_lea.vmem [#allocation26], 124
    %v1570 = vpack.c.bf16 0.0, %v1568
    %s1572 = ssub.s32 16, 1
    %1573 = vst [vmem:[%s1569] sm:%s1572] %v1570
    %v1574 = vld [vmem:[%s1] sm:$0xf]
    %v1575 = vunpack.c.l.bf16 %v1574
    %v1576 = vunpack.c.h.bf16 %v1574
    %v1577 = vpack.c.bf16 0.0, %v1575
    %s1579 = ssub.s32 16, 1
    %1580 = vst [vmem:[#allocation27] sm:%s1579] %v1577
    %s1581 = scalar_lea.vmem %s1, 4
    %v1582 = vld [vmem:[%s1581] sm:$0xf]
    %v1583 = vunpack.c.l.bf16 %v1582
    %v1584 = vunpack.c.h.bf16 %v1582
    %s1585 = scalar_lea.vmem [#allocation27], 4
    %v1586 = vpack.c.bf16 0.0, %v1583
    %s1588 = ssub.s32 16, 1
    %1589 = vst [vmem:[%s1585] sm:%s1588] %v1586
    %s1590 = scalar_lea.vmem %s1, 8
    %v1591 = vld [vmem:[%s1590] sm:$0xf]
    %v1592 = vunpack.c.l.bf16 %v1591
    %v1593 = vunpack.c.h.bf16 %v1591
    %s1594 = scalar_lea.vmem [#allocation27], 8
    %v1595 = vpack.c.bf16 0.0, %v1592
    %s1597 = ssub.s32 16, 1
    %1598 = vst [vmem:[%s1594] sm:%s1597] %v1595
    %s1599 = scalar_lea.vmem %s1, 12
    %v1600 = vld [vmem:[%s1599] sm:$0xf]
    %v1601 = vunpack.c.l.bf16 %v1600
    %v1602 = vunpack.c.h.bf16 %v1600
    %s1603 = scalar_lea.vmem [#allocation27], 12
    %v1604 = vpack.c.bf16 0.0, %v1601
    %s1606 = ssub.s32 16, 1
    %1607 = vst [vmem:[%s1603] sm:%s1606] %v1604
    %s1608 = scalar_lea.vmem %s1, 16
    %v1609 = vld [vmem:[%s1608] sm:$0xf]
    %v1610 = vunpack.c.l.bf16 %v1609
    %v1611 = vunpack.c.h.bf16 %v1609
    %s1612 = scalar_lea.vmem [#allocation27], 16
    %v1613 = vpack.c.bf16 0.0, %v1610
    %s1615 = ssub.s32 16, 1
    %1616 = vst [vmem:[%s1612] sm:%s1615] %v1613
    %s1617 = scalar_lea.vmem %s1, 20
    %v1618 = vld [vmem:[%s1617] sm:$0xf]
    %v1619 = vunpack.c.l.bf16 %v1618
    %v1620 = vunpack.c.h.bf16 %v1618
    %s1621 = scalar_lea.vmem [#allocation27], 20
    %v1622 = vpack.c.bf16 0.0, %v1619
    %s1624 = ssub.s32 16, 1
    %1625 = vst [vmem:[%s1621] sm:%s1624] %v1622
    %s1626 = scalar_lea.vmem %s1, 24
    %v1627 = vld [vmem:[%s1626] sm:$0xf]
    %v1628 = vunpack.c.l.bf16 %v1627
    %v1629 = vunpack.c.h.bf16 %v1627
    %s1630 = scalar_lea.vmem [#allocation27], 24
    %v1631 = vpack.c.bf16 0.0, %v1628
    %s1633 = ssub.s32 16, 1
    %1634 = vst [vmem:[%s1630] sm:%s1633] %v1631
    %s1635 = scalar_lea.vmem %s1, 28
    %v1636 = vld [vmem:[%s1635] sm:$0xf]
    %v1637 = vunpack.c.l.bf16 %v1636
    %v1638 = vunpack.c.h.bf16 %v1636
    %s1639 = scalar_lea.vmem [#allocation27], 28
    %v1640 = vpack.c.bf16 0.0, %v1637
    %s1642 = ssub.s32 16, 1
    %1643 = vst [vmem:[%s1639] sm:%s1642] %v1640
    %s1644 = scalar_lea.vmem %s1, 32
    %v1645 = vld [vmem:[%s1644] sm:$0xf]
    %v1646 = vunpack.c.l.bf16 %v1645
    %v1647 = vunpack.c.h.bf16 %v1645
    %s1648 = scalar_lea.vmem [#allocation27], 32
    %v1649 = vpack.c.bf16 0.0, %v1646
    %s1651 = ssub.s32 16, 1
    %1652 = vst [vmem:[%s1648] sm:%s1651] %v1649
    %s1653 = scalar_lea.vmem %s1, 36
    %v1654 = vld [vmem:[%s1653] sm:$0xf]
    %v1655 = vunpack.c.l.bf16 %v1654
    %v1656 = vunpack.c.h.bf16 %v1654
    %s1657 = scalar_lea.vmem [#allocation27], 36
    %v1658 = vpack.c.bf16 0.0, %v1655
    %s1660 = ssub.s32 16, 1
    %1661 = vst [vmem:[%s1657] sm:%s1660] %v1658
    %s1662 = scalar_lea.vmem %s1, 40
    %v1663 = vld [vmem:[%s1662] sm:$0xf]
    %v1664 = vunpack.c.l.bf16 %v1663
    %v1665 = vunpack.c.h.bf16 %v1663
    %s1666 = scalar_lea.vmem [#allocation27], 40
    %v1667 = vpack.c.bf16 0.0, %v1664
    %s1669 = ssub.s32 16, 1
    %1670 = vst [vmem:[%s1666] sm:%s1669] %v1667
    %s1671 = scalar_lea.vmem %s1, 44
    %v1672 = vld [vmem:[%s1671] sm:$0xf]
    %v1673 = vunpack.c.l.bf16 %v1672
    %v1674 = vunpack.c.h.bf16 %v1672
    %s1675 = scalar_lea.vmem [#allocation27], 44
    %v1676 = vpack.c.bf16 0.0, %v1673
    %s1678 = ssub.s32 16, 1
    %1679 = vst [vmem:[%s1675] sm:%s1678] %v1676
    %s1680 = scalar_lea.vmem %s1, 48
    %v1681 = vld [vmem:[%s1680] sm:$0xf]
    %v1682 = vunpack.c.l.bf16 %v1681
    %v1683 = vunpack.c.h.bf16 %v1681
    %s1684 = scalar_lea.vmem [#allocation27], 48
    %v1685 = vpack.c.bf16 0.0, %v1682
    %s1687 = ssub.s32 16, 1
    %1688 = vst [vmem:[%s1684] sm:%s1687] %v1685
    %s1689 = scalar_lea.vmem %s1, 52
    %v1690 = vld [vmem:[%s1689] sm:$0xf]
    %v1691 = vunpack.c.l.bf16 %v1690
    %v1692 = vunpack.c.h.bf16 %v1690
    %s1693 = scalar_lea.vmem [#allocation27], 52
    %v1694 = vpack.c.bf16 0.0, %v1691
    %s1696 = ssub.s32 16, 1
    %1697 = vst [vmem:[%s1693] sm:%s1696] %v1694
    %s1698 = scalar_lea.vmem %s1, 56
    %v1699 = vld [vmem:[%s1698] sm:$0xf]
    %v1700 = vunpack.c.l.bf16 %v1699
    %v1701 = vunpack.c.h.bf16 %v1699
    %s1702 = scalar_lea.vmem [#allocation27], 56
    %v1703 = vpack.c.bf16 0.0, %v1700
    %s1705 = ssub.s32 16, 1
    %1706 = vst [vmem:[%s1702] sm:%s1705] %v1703
    %s1707 = scalar_lea.vmem %s1, 60
    %v1708 = vld [vmem:[%s1707] sm:$0xf]
    %v1709 = vunpack.c.l.bf16 %v1708
    %v1710 = vunpack.c.h.bf16 %v1708
    %s1711 = scalar_lea.vmem [#allocation27], 60
    %v1712 = vpack.c.bf16 0.0, %v1709
    %s1714 = ssub.s32 16, 1
    %1715 = vst [vmem:[%s1711] sm:%s1714] %v1712
    %s1716 = scalar_lea.vmem %s1, 64
    %s1718 = sor.u32 255, 127
    %s1719 = sand.u32 %s1718, 85
    %s1720 = sshrl.u32 %s1719, 1
    %s1721 = sor.u32 %s1719, %s1720
    %s1722 = sand.u32 51, %s1721
    %s1723 = sshrl.u32 %s1722, 2
    %s1724 = sor.u32 %s1722, %s1723
    %s1725 = sand.u32 15, %s1724
    %v1726 = vld [vmem:[%s1716] sm:%s1725]
    %v1727 = vunpack.c.l.bf16 %v1726
    %v1728 = vunpack.c.h.bf16 %v1726
    %s1729 = scalar_lea.vmem [#allocation27], 64
    %v1730 = vpack.c.bf16 0.0, %v1727
    %s1732 = ssub.s32 16, 1
    %1733 = vst [vmem:[%s1729] sm:%s1732] %v1730
    %s1734 = scalar_lea.vmem %s1, 68
    %s1736 = sor.u32 255, 127
    %s1737 = sand.u32 %s1736, 85
    %s1738 = sshrl.u32 %s1737, 1
    %s1739 = sor.u32 %s1737, %s1738
    %s1740 = sand.u32 51, %s1739
    %s1741 = sshrl.u32 %s1740, 2
    %s1742 = sor.u32 %s1740, %s1741
    %s1743 = sand.u32 15, %s1742
    %v1744 = vld [vmem:[%s1734] sm:%s1743]
    %v1745 = vunpack.c.l.bf16 %v1744
    %v1746 = vunpack.c.h.bf16 %v1744
    %s1747 = scalar_lea.vmem [#allocation27], 68
    %v1748 = vpack.c.bf16 0.0, %v1745
    %s1750 = ssub.s32 16, 1
    %1751 = vst [vmem:[%s1747] sm:%s1750] %v1748
    %s1752 = scalar_lea.vmem %s1, 72
    %s1754 = sor.u32 255, 127
    %s1755 = sand.u32 %s1754, 85
    %s1756 = sshrl.u32 %s1755, 1
    %s1757 = sor.u32 %s1755, %s1756
    %s1758 = sand.u32 51, %s1757
    %s1759 = sshrl.u32 %s1758, 2
    %s1760 = sor.u32 %s1758, %s1759
    %s1761 = sand.u32 15, %s1760
    %v1762 = vld [vmem:[%s1752] sm:%s1761]
    %v1763 = vunpack.c.l.bf16 %v1762
    %v1764 = vunpack.c.h.bf16 %v1762
    %s1765 = scalar_lea.vmem [#allocation27], 72
    %v1766 = vpack.c.bf16 0.0, %v1763
    %s1768 = ssub.s32 16, 1
    %1769 = vst [vmem:[%s1765] sm:%s1768] %v1766
    %s1770 = scalar_lea.vmem %s1, 76
    %s1772 = sor.u32 255, 127
    %s1773 = sand.u32 %s1772, 85
    %s1774 = sshrl.u32 %s1773, 1
    %s1775 = sor.u32 %s1773, %s1774
    %s1776 = sand.u32 51, %s1775
    %s1777 = sshrl.u32 %s1776, 2
    %s1778 = sor.u32 %s1776, %s1777
    %s1779 = sand.u32 15, %s1778
    %v1780 = vld [vmem:[%s1770] sm:%s1779]
    %v1781 = vunpack.c.l.bf16 %v1780
    %v1782 = vunpack.c.h.bf16 %v1780
    %s1783 = scalar_lea.vmem [#allocation27], 76
    %v1784 = vpack.c.bf16 0.0, %v1781
    %s1786 = ssub.s32 16, 1
    %1787 = vst [vmem:[%s1783] sm:%s1786] %v1784
    %s1788 = scalar_lea.vmem %s1, 80
    %s1790 = sor.u32 255, 127
    %s1791 = sand.u32 %s1790, 85
    %s1792 = sshrl.u32 %s1791, 1
    %s1793 = sor.u32 %s1791, %s1792
    %s1794 = sand.u32 51, %s1793
    %s1795 = sshrl.u32 %s1794, 2
    %s1796 = sor.u32 %s1794, %s1795
    %s1797 = sand.u32 15, %s1796
    %v1798 = vld [vmem:[%s1788] sm:%s1797]
    %v1799 = vunpack.c.l.bf16 %v1798
    %v1800 = vunpack.c.h.bf16 %v1798
    %s1801 = scalar_lea.vmem [#allocation27], 80
    %v1802 = vpack.c.bf16 0.0, %v1799
    %s1804 = ssub.s32 16, 1
    %1805 = vst [vmem:[%s1801] sm:%s1804] %v1802
    %s1806 = scalar_lea.vmem %s1, 84
    %s1808 = sor.u32 255, 127
    %s1809 = sand.u32 %s1808, 85
    %s1810 = sshrl.u32 %s1809, 1
    %s1811 = sor.u32 %s1809, %s1810
    %s1812 = sand.u32 51, %s1811
    %s1813 = sshrl.u32 %s1812, 2
    %s1814 = sor.u32 %s1812, %s1813
    %s1815 = sand.u32 15, %s1814
    %v1816 = vld [vmem:[%s1806] sm:%s1815]
    %v1817 = vunpack.c.l.bf16 %v1816
    %v1818 = vunpack.c.h.bf16 %v1816
    %s1819 = scalar_lea.vmem [#allocation27], 84
    %v1820 = vpack.c.bf16 0.0, %v1817
    %s1822 = ssub.s32 16, 1
    %1823 = vst [vmem:[%s1819] sm:%s1822] %v1820
    %s1824 = scalar_lea.vmem %s1, 88
    %s1826 = sor.u32 255, 127
    %s1827 = sand.u32 %s1826, 85
    %s1828 = sshrl.u32 %s1827, 1
    %s1829 = sor.u32 %s1827, %s1828
    %s1830 = sand.u32 51, %s1829
    %s1831 = sshrl.u32 %s1830, 2
    %s1832 = sor.u32 %s1830, %s1831
    %s1833 = sand.u32 15, %s1832
    %v1834 = vld [vmem:[%s1824] sm:%s1833]
    %v1835 = vunpack.c.l.bf16 %v1834
    %v1836 = vunpack.c.h.bf16 %v1834
    %s1837 = scalar_lea.vmem [#allocation27], 88
    %v1838 = vpack.c.bf16 0.0, %v1835
    %s1840 = ssub.s32 16, 1
    %1841 = vst [vmem:[%s1837] sm:%s1840] %v1838
    %s1842 = scalar_lea.vmem %s1, 92
    %s1844 = sor.u32 255, 127
    %s1845 = sand.u32 %s1844, 85
    %s1846 = sshrl.u32 %s1845, 1
    %s1847 = sor.u32 %s1845, %s1846
    %s1848 = sand.u32 51, %s1847
    %s1849 = sshrl.u32 %s1848, 2
    %s1850 = sor.u32 %s1848, %s1849
    %s1851 = sand.u32 15, %s1850
    %v1852 = vld [vmem:[%s1842] sm:%s1851]
    %v1853 = vunpack.c.l.bf16 %v1852
    %v1854 = vunpack.c.h.bf16 %v1852
    %s1855 = scalar_lea.vmem [#allocation27], 92
    %v1856 = vpack.c.bf16 0.0, %v1853
    %s1858 = ssub.s32 16, 1
    %1859 = vst [vmem:[%s1855] sm:%s1858] %v1856
    %s1860 = scalar_lea.vmem %s1, 96
    %s1862 = sor.u32 255, 127
    %s1863 = sand.u32 %s1862, 85
    %s1864 = sshrl.u32 %s1863, 1
    %s1865 = sor.u32 %s1863, %s1864
    %s1866 = sand.u32 51, %s1865
    %s1867 = sshrl.u32 %s1866, 2
    %s1868 = sor.u32 %s1866, %s1867
    %s1869 = sand.u32 15, %s1868
    %v1870 = vld [vmem:[%s1860] sm:%s1869]
    %v1871 = vunpack.c.l.bf16 %v1870
    %v1872 = vunpack.c.h.bf16 %v1870
    %s1873 = scalar_lea.vmem [#allocation27], 96
    %v1874 = vpack.c.bf16 0.0, %v1871
    %s1876 = ssub.s32 16, 1
    %1877 = vst [vmem:[%s1873] sm:%s1876] %v1874
    %s1878 = scalar_lea.vmem %s1, 100
    %s1880 = sor.u32 255, 127
    %s1881 = sand.u32 %s1880, 85
    %s1882 = sshrl.u32 %s1881, 1
    %s1883 = sor.u32 %s1881, %s1882
    %s1884 = sand.u32 51, %s1883
    %s1885 = sshrl.u32 %s1884, 2
    %s1886 = sor.u32 %s1884, %s1885
    %s1887 = sand.u32 15, %s1886
    %v1888 = vld [vmem:[%s1878] sm:%s1887]
    %v1889 = vunpack.c.l.bf16 %v1888
    %v1890 = vunpack.c.h.bf16 %v1888
    %s1891 = scalar_lea.vmem [#allocation27], 100
    %v1892 = vpack.c.bf16 0.0, %v1889
    %s1894 = ssub.s32 16, 1
    %1895 = vst [vmem:[%s1891] sm:%s1894] %v1892
    %s1896 = scalar_lea.vmem %s1, 104
    %s1898 = sor.u32 255, 127
    %s1899 = sand.u32 %s1898, 85
    %s1900 = sshrl.u32 %s1899, 1
    %s1901 = sor.u32 %s1899, %s1900
    %s1902 = sand.u32 51, %s1901
    %s1903 = sshrl.u32 %s1902, 2
    %s1904 = sor.u32 %s1902, %s1903
    %s1905 = sand.u32 15, %s1904
    %v1906 = vld [vmem:[%s1896] sm:%s1905]
    %v1907 = vunpack.c.l.bf16 %v1906
    %v1908 = vunpack.c.h.bf16 %v1906
    %s1909 = scalar_lea.vmem [#allocation27], 104
    %v1910 = vpack.c.bf16 0.0, %v1907
    %s1912 = ssub.s32 16, 1
    %1913 = vst [vmem:[%s1909] sm:%s1912] %v1910
    %s1914 = scalar_lea.vmem %s1, 108
    %s1916 = sor.u32 255, 127
    %s1917 = sand.u32 %s1916, 85
    %s1918 = sshrl.u32 %s1917, 1
    %s1919 = sor.u32 %s1917, %s1918
    %s1920 = sand.u32 51, %s1919
    %s1921 = sshrl.u32 %s1920, 2
    %s1922 = sor.u32 %s1920, %s1921
    %s1923 = sand.u32 15, %s1922
    %v1924 = vld [vmem:[%s1914] sm:%s1923]
    %v1925 = vunpack.c.l.bf16 %v1924
    %v1926 = vunpack.c.h.bf16 %v1924
    %s1927 = scalar_lea.vmem [#allocation27], 108
    %v1928 = vpack.c.bf16 0.0, %v1925
    %s1930 = ssub.s32 16, 1
    %1931 = vst [vmem:[%s1927] sm:%s1930] %v1928
    %s1932 = scalar_lea.vmem %s1, 112
    %s1934 = sor.u32 255, 127
    %s1935 = sand.u32 %s1934, 85
    %s1936 = sshrl.u32 %s1935, 1
    %s1937 = sor.u32 %s1935, %s1936
    %s1938 = sand.u32 51, %s1937
    %s1939 = sshrl.u32 %s1938, 2
    %s1940 = sor.u32 %s1938, %s1939
    %s1941 = sand.u32 15, %s1940
    %v1942 = vld [vmem:[%s1932] sm:%s1941]
    %v1943 = vunpack.c.l.bf16 %v1942
    %v1944 = vunpack.c.h.bf16 %v1942
    %s1945 = scalar_lea.vmem [#allocation27], 112
    %v1946 = vpack.c.bf16 0.0, %v1943
    %s1948 = ssub.s32 16, 1
    %1949 = vst [vmem:[%s1945] sm:%s1948] %v1946
    %s1950 = scalar_lea.vmem %s1, 116
    %s1952 = sor.u32 255, 127
    %s1953 = sand.u32 %s1952, 85
    %s1954 = sshrl.u32 %s1953, 1
    %s1955 = sor.u32 %s1953, %s1954
    %s1956 = sand.u32 51, %s1955
    %s1957 = sshrl.u32 %s1956, 2
    %s1958 = sor.u32 %s1956, %s1957
    %s1959 = sand.u32 15, %s1958
    %v1960 = vld [vmem:[%s1950] sm:%s1959]
    %v1961 = vunpack.c.l.bf16 %v1960
    %v1962 = vunpack.c.h.bf16 %v1960
    %s1963 = scalar_lea.vmem [#allocation27], 116
    %v1964 = vpack.c.bf16 0.0, %v1961
    %s1966 = ssub.s32 16, 1
    %1967 = vst [vmem:[%s1963] sm:%s1966] %v1964
    %s1968 = scalar_lea.vmem %s1, 120
    %s1970 = sor.u32 255, 127
    %s1971 = sand.u32 %s1970, 85
    %s1972 = sshrl.u32 %s1971, 1
    %s1973 = sor.u32 %s1971, %s1972
    %s1974 = sand.u32 51, %s1973
    %s1975 = sshrl.u32 %s1974, 2
    %s1976 = sor.u32 %s1974, %s1975
    %s1977 = sand.u32 15, %s1976
    %v1978 = vld [vmem:[%s1968] sm:%s1977]
    %v1979 = vunpack.c.l.bf16 %v1978
    %v1980 = vunpack.c.h.bf16 %v1978
    %s1981 = scalar_lea.vmem [#allocation27], 120
    %v1982 = vpack.c.bf16 0.0, %v1979
    %s1984 = ssub.s32 16, 1
    %1985 = vst [vmem:[%s1981] sm:%s1984] %v1982
    %s1986 = scalar_lea.vmem %s1, 124
    %s1988 = sor.u32 255, 127
    %s1989 = sand.u32 %s1988, 85
    %s1990 = sshrl.u32 %s1989, 1
    %s1991 = sor.u32 %s1989, %s1990
    %s1992 = sand.u32 51, %s1991
    %s1993 = sshrl.u32 %s1992, 2
    %s1994 = sor.u32 %s1992, %s1993
    %s1995 = sand.u32 15, %s1994
    %v1996 = vld [vmem:[%s1986] sm:%s1995]
    %v1997 = vunpack.c.l.bf16 %v1996
    %v1998 = vunpack.c.h.bf16 %v1996
    %s1999 = scalar_lea.vmem [#allocation27], 124
    %v2000 = vpack.c.bf16 0.0, %v1997
    %s2002 = ssub.s32 16, 1
    %2003 = vst [vmem:[%s1999] sm:%s2002] %v2000
    %s2004 = scalar_lea.vmem %s1, 128
    %s2006 = sor.u32 255, 127
    %s2007 = sand.u32 %s2006, 85
    %s2008 = sshrl.u32 %s2007, 1
    %s2009 = sor.u32 %s2007, %s2008
    %s2010 = sand.u32 51, %s2009
    %s2011 = sshrl.u32 %s2010, 2
    %s2012 = sor.u32 %s2010, %s2011
    %s2013 = sand.u32 15, %s2012
    %v2014 = vld [vmem:[%s2004] sm:%s2013]
    %v2015 = vunpack.c.l.bf16 %v2014
    %v2016 = vunpack.c.h.bf16 %v2014
    %s2017 = scalar_lea.vmem [#allocation27], 128
    %v2018 = vpack.c.bf16 0.0, %v2015
    %s2020 = ssub.s32 16, 1
    %2021 = vst [vmem:[%s2017] sm:%s2020] %v2018
    %s2022 = scalar_lea.vmem %s1, 132
    %s2024 = sor.u32 255, 127
    %s2025 = sand.u32 %s2024, 85
    %s2026 = sshrl.u32 %s2025, 1
    %s2027 = sor.u32 %s2025, %s2026
    %s2028 = sand.u32 51, %s2027
    %s2029 = sshrl.u32 %s2028, 2
    %s2030 = sor.u32 %s2028, %s2029
    %s2031 = sand.u32 15, %s2030
    %v2032 = vld [vmem:[%s2022] sm:%s2031]
    %v2033 = vunpack.c.l.bf16 %v2032
    %v2034 = vunpack.c.h.bf16 %v2032
    %s2035 = scalar_lea.vmem [#allocation27], 132
    %v2036 = vpack.c.bf16 0.0, %v2033
    %s2038 = ssub.s32 16, 1
    %2039 = vst [vmem:[%s2035] sm:%s2038] %v2036
    %s2040 = scalar_lea.vmem %s1, 136
    %s2042 = sor.u32 255, 127
    %s2043 = sand.u32 %s2042, 85
    %s2044 = sshrl.u32 %s2043, 1
    %s2045 = sor.u32 %s2043, %s2044
    %s2046 = sand.u32 51, %s2045
    %s2047 = sshrl.u32 %s2046, 2
    %s2048 = sor.u32 %s2046, %s2047
    %s2049 = sand.u32 15, %s2048
    %v2050 = vld [vmem:[%s2040] sm:%s2049]
    %v2051 = vunpack.c.l.bf16 %v2050
    %v2052 = vunpack.c.h.bf16 %v2050
    %s2053 = scalar_lea.vmem [#allocation27], 136
    %v2054 = vpack.c.bf16 0.0, %v2051
    %s2056 = ssub.s32 16, 1
    %2057 = vst [vmem:[%s2053] sm:%s2056] %v2054
    %s2058 = scalar_lea.vmem %s1, 140
    %s2060 = sor.u32 255, 127
    %s2061 = sand.u32 %s2060, 85
    %s2062 = sshrl.u32 %s2061, 1
    %s2063 = sor.u32 %s2061, %s2062
    %s2064 = sand.u32 51, %s2063
    %s2065 = sshrl.u32 %s2064, 2
    %s2066 = sor.u32 %s2064, %s2065
    %s2067 = sand.u32 15, %s2066
    %v2068 = vld [vmem:[%s2058] sm:%s2067]
    %v2069 = vunpack.c.l.bf16 %v2068
    %v2070 = vunpack.c.h.bf16 %v2068
    %s2071 = scalar_lea.vmem [#allocation27], 140
    %v2072 = vpack.c.bf16 0.0, %v2069
    %s2074 = ssub.s32 16, 1
    %2075 = vst [vmem:[%s2071] sm:%s2074] %v2072
    %s2076 = scalar_lea.vmem %s1, 144
    %s2078 = sor.u32 255, 127
    %s2079 = sand.u32 %s2078, 85
    %s2080 = sshrl.u32 %s2079, 1
    %s2081 = sor.u32 %s2079, %s2080
    %s2082 = sand.u32 51, %s2081
    %s2083 = sshrl.u32 %s2082, 2
    %s2084 = sor.u32 %s2082, %s2083
    %s2085 = sand.u32 15, %s2084
    %v2086 = vld [vmem:[%s2076] sm:%s2085]
    %v2087 = vunpack.c.l.bf16 %v2086
    %v2088 = vunpack.c.h.bf16 %v2086
    %s2089 = scalar_lea.vmem [#allocation27], 144
    %v2090 = vpack.c.bf16 0.0, %v2087
    %s2092 = ssub.s32 16, 1
    %2093 = vst [vmem:[%s2089] sm:%s2092] %v2090
    %s2094 = scalar_lea.vmem %s1, 148
    %s2096 = sor.u32 255, 127
    %s2097 = sand.u32 %s2096, 85
    %s2098 = sshrl.u32 %s2097, 1
    %s2099 = sor.u32 %s2097, %s2098
    %s2100 = sand.u32 51, %s2099
    %s2101 = sshrl.u32 %s2100, 2
    %s2102 = sor.u32 %s2100, %s2101
    %s2103 = sand.u32 15, %s2102
    %v2104 = vld [vmem:[%s2094] sm:%s2103]
    %v2105 = vunpack.c.l.bf16 %v2104
    %v2106 = vunpack.c.h.bf16 %v2104
    %s2107 = scalar_lea.vmem [#allocation27], 148
    %v2108 = vpack.c.bf16 0.0, %v2105
    %s2110 = ssub.s32 16, 1
    %2111 = vst [vmem:[%s2107] sm:%s2110] %v2108
    %s2112 = scalar_lea.vmem %s1, 152
    %s2114 = sor.u32 255, 127
    %s2115 = sand.u32 %s2114, 85
    %s2116 = sshrl.u32 %s2115, 1
    %s2117 = sor.u32 %s2115, %s2116
    %s2118 = sand.u32 51, %s2117
    %s2119 = sshrl.u32 %s2118, 2
    %s2120 = sor.u32 %s2118, %s2119
    %s2121 = sand.u32 15, %s2120
    %v2122 = vld [vmem:[%s2112] sm:%s2121]
    %v2123 = vunpack.c.l.bf16 %v2122
    %v2124 = vunpack.c.h.bf16 %v2122
    %s2125 = scalar_lea.vmem [#allocation27], 152
    %v2126 = vpack.c.bf16 0.0, %v2123
    %s2128 = ssub.s32 16, 1
    %2129 = vst [vmem:[%s2125] sm:%s2128] %v2126
    %s2130 = scalar_lea.vmem %s1, 156
    %s2132 = sor.u32 255, 127
    %s2133 = sand.u32 %s2132, 85
    %s2134 = sshrl.u32 %s2133, 1
    %s2135 = sor.u32 %s2133, %s2134
    %s2136 = sand.u32 51, %s2135
    %s2137 = sshrl.u32 %s2136, 2
    %s2138 = sor.u32 %s2136, %s2137
    %s2139 = sand.u32 15, %s2138
    %v2140 = vld [vmem:[%s2130] sm:%s2139]
    %v2141 = vunpack.c.l.bf16 %v2140
    %v2142 = vunpack.c.h.bf16 %v2140
    %s2143 = scalar_lea.vmem [#allocation27], 156
    %v2144 = vpack.c.bf16 0.0, %v2141
    %s2146 = ssub.s32 16, 1
    %2147 = vst [vmem:[%s2143] sm:%s2146] %v2144
    %s2148 = scalar_lea.vmem [#allocation27], 160
    %v2149 = vpack.c.bf16 0.0, %v28
    %s2151 = ssub.s32 16, 1
    %2152 = vst [vmem:[%s2148] sm:%s2151] %v2149
    %s2153 = scalar_lea.vmem [#allocation27], 164
    %v2154 = vpack.c.bf16 0.0, %v28
    %s2156 = ssub.s32 16, 1
    %2157 = vst [vmem:[%s2153] sm:%s2156] %v2154
    %s2158 = scalar_lea.vmem [#allocation27], 168
    %v2159 = vpack.c.bf16 0.0, %v28
    %s2161 = ssub.s32 16, 1
    %2162 = vst [vmem:[%s2158] sm:%s2161] %v2159
    %s2163 = scalar_lea.vmem [#allocation27], 172
    %v2164 = vpack.c.bf16 0.0, %v28
    %s2166 = ssub.s32 16, 1
    %2167 = vst [vmem:[%s2163] sm:%s2166] %v2164
    %s2168 = scalar_lea.vmem [#allocation27], 176
    %v2169 = vpack.c.bf16 0.0, %v28
    %s2171 = ssub.s32 16, 1
    %2172 = vst [vmem:[%s2168] sm:%s2171] %v2169
    %s2173 = scalar_lea.vmem [#allocation27], 180
    %v2174 = vpack.c.bf16 0.0, %v28
    %s2176 = ssub.s32 16, 1
    %2177 = vst [vmem:[%s2173] sm:%s2176] %v2174
    %s2178 = scalar_lea.vmem [#allocation27], 184
    %v2179 = vpack.c.bf16 0.0, %v28
    %s2181 = ssub.s32 16, 1
    %2182 = vst [vmem:[%s2178] sm:%s2181] %v2179
    %s2183 = scalar_lea.vmem [#allocation27], 188
    %v2184 = vpack.c.bf16 0.0, %v28
    %s2186 = ssub.s32 16, 1
    %2187 = vst [vmem:[%s2183] sm:%s2186] %v2184
    %s2188 = scalar_lea.vmem [#allocation27], 192
    %v2189 = vpack.c.bf16 0.0, %v28
    %s2191 = ssub.s32 16, 1
    %2192 = vst [vmem:[%s2188] sm:%s2191] %v2189
    %s2193 = scalar_lea.vmem [#allocation27], 196
    %v2194 = vpack.c.bf16 0.0, %v28
    %s2196 = ssub.s32 16, 1
    %2197 = vst [vmem:[%s2193] sm:%s2196] %v2194
    %s2198 = scalar_lea.vmem [#allocation27], 200
    %v2199 = vpack.c.bf16 0.0, %v28
    %s2201 = ssub.s32 16, 1
    %2202 = vst [vmem:[%s2198] sm:%s2201] %v2199
    %s2203 = scalar_lea.vmem [#allocation27], 204
    %v2204 = vpack.c.bf16 0.0, %v28
    %s2206 = ssub.s32 16, 1
    %2207 = vst [vmem:[%s2203] sm:%s2206] %v2204
    %s2208 = scalar_lea.vmem [#allocation27], 208
    %v2209 = vpack.c.bf16 0.0, %v28
    %s2211 = ssub.s32 16, 1
    %2212 = vst [vmem:[%s2208] sm:%s2211] %v2209
    %s2213 = scalar_lea.vmem [#allocation27], 212
    %v2214 = vpack.c.bf16 0.0, %v28
    %s2216 = ssub.s32 16, 1
    %2217 = vst [vmem:[%s2213] sm:%s2216] %v2214
    %s2218 = scalar_lea.vmem [#allocation27], 216
    %v2219 = vpack.c.bf16 0.0, %v28
    %s2221 = ssub.s32 16, 1
    %2222 = vst [vmem:[%s2218] sm:%s2221] %v2219
    %s2223 = scalar_lea.vmem [#allocation27], 220
    %v2224 = vpack.c.bf16 0.0, %v28
    %s2226 = ssub.s32 16, 1
    %2227 = vst [vmem:[%s2223] sm:%s2226] %v2224
    %s2228 = scalar_lea.vmem [#allocation27], 224
    %v2229 = vpack.c.bf16 0.0, %v28
    %s2231 = ssub.s32 16, 1
    %2232 = vst [vmem:[%s2228] sm:%s2231] %v2229
    %s2233 = scalar_lea.vmem [#allocation27], 228
    %v2234 = vpack.c.bf16 0.0, %v28
    %s2236 = ssub.s32 16, 1
    %2237 = vst [vmem:[%s2233] sm:%s2236] %v2234
    %s2238 = scalar_lea.vmem [#allocation27], 232
    %v2239 = vpack.c.bf16 0.0, %v28
    %s2241 = ssub.s32 16, 1
    %2242 = vst [vmem:[%s2238] sm:%s2241] %v2239
    %s2243 = scalar_lea.vmem [#allocation27], 236
    %v2244 = vpack.c.bf16 0.0, %v28
    %s2246 = ssub.s32 16, 1
    %2247 = vst [vmem:[%s2243] sm:%s2246] %v2244
    %s2248 = scalar_lea.vmem [#allocation27], 240
    %v2249 = vpack.c.bf16 0.0, %v28
    %s2251 = ssub.s32 16, 1
    %2252 = vst [vmem:[%s2248] sm:%s2251] %v2249
    %s2253 = scalar_lea.vmem [#allocation27], 244
    %v2254 = vpack.c.bf16 0.0, %v28
    %s2256 = ssub.s32 16, 1
    %2257 = vst [vmem:[%s2253] sm:%s2256] %v2254
    %s2258 = scalar_lea.vmem [#allocation27], 248
    %v2259 = vpack.c.bf16 0.0, %v28
    %s2261 = ssub.s32 16, 1
    %2262 = vst [vmem:[%s2258] sm:%s2261] %v2259
    %s2263 = scalar_lea.vmem [#allocation27], 252
    %v2264 = vpack.c.bf16 0.0, %v28
    %s2266 = ssub.s32 16, 1
    %2267 = vst [vmem:[%s2263] sm:%s2266] %v2264
    %v2269 = vld [vmem:[#allocation24] sm:$0xf]
    %v2270 = vld [vmem:[#allocation24 + $0x4] sm:$0xf]
    %v2271 = vld [vmem:[#allocation24 + $0x8] sm:$0xf]
    %v2272 = vld [vmem:[#allocation24 + $0xc] sm:$0xf]
    %v2273 = vld [vmem:[#allocation24 + $0x10] sm:$0xf]
    %v2274 = vld [vmem:[#allocation24 + $0x14] sm:$0xf]
    %v2275 = vld [vmem:[#allocation24 + $0x18] sm:$0xf]
    %v2276 = vld [vmem:[#allocation24 + $0x1c] sm:$0xf]
    %v2277 = vld [vmem:[#allocation24 + $0x20] sm:$0xf]
    %v2278 = vld [vmem:[#allocation24 + $0x24] sm:$0xf]
    %v2279 = vld [vmem:[#allocation24 + $0x28] sm:$0xf]
    %v2280 = vld [vmem:[#allocation24 + $0x2c] sm:$0xf]
    %v2281 = vld [vmem:[#allocation24 + $0x30] sm:$0xf]
    %v2282 = vld [vmem:[#allocation24 + $0x34] sm:$0xf]
    %v2283 = vld [vmem:[#allocation24 + $0x38] sm:$0xf]
    %v2284 = vld [vmem:[#allocation24 + $0x3c] sm:$0xf]
    %v2285 = vld [vmem:[#allocation25] sm:$0xff]
    %v2286 = vld [vmem:[#allocation25 + $0x8] sm:$0xff]
    %v2287 = vld [vmem:[#allocation25 + $0x10] sm:$0xff]
    %v2288 = vld [vmem:[#allocation25 + $0x18] sm:$0xff]
    %v2289 = vld [vmem:[#allocation25 + $0x20] sm:$0xff]
    %v2290 = vld [vmem:[#allocation25 + $0x28] sm:$0xff]
    %v2291 = vld [vmem:[#allocation25 + $0x30] sm:$0xff]
    %v2292 = vld [vmem:[#allocation25 + $0x38] sm:$0xff]
    %v2293 = vld [vmem:[#allocation25 + $0x40] sm:$0xff]
    %v2294 = vld [vmem:[#allocation25 + $0x48] sm:$0xff]
    %v2295 = vld [vmem:[#allocation25 + $0x50] sm:$0xff]
    %v2296 = vld [vmem:[#allocation25 + $0x58] sm:$0xff]
    %v2297 = vld [vmem:[#allocation25 + $0x60] sm:$0xff]
    %v2298 = vld [vmem:[#allocation25 + $0x68] sm:$0xff]
    %v2299 = vld [vmem:[#allocation25 + $0x70] sm:$0xff]
    %v2300 = vld [vmem:[#allocation25 + $0x78] sm:$0xff]
    %v2301 = vld [vmem:[#allocation26] sm:$0xff]
    %v2302 = vld [vmem:[#allocation26 + $0x8] sm:$0xff]
    %v2303 = vld [vmem:[#allocation26 + $0x10] sm:$0xff]
    %v2304 = vld [vmem:[#allocation26 + $0x18] sm:$0xff]
    %v2305 = vld [vmem:[#allocation26 + $0x20] sm:$0xff]
    %v2306 = vld [vmem:[#allocation26 + $0x28] sm:$0xff]
    %v2307 = vld [vmem:[#allocation26 + $0x30] sm:$0xff]
    %v2308 = vld [vmem:[#allocation26 + $0x38] sm:$0xff]
    %v2309 = vld [vmem:[#allocation26 + $0x40] sm:$0xff]
    %v2310 = vld [vmem:[#allocation26 + $0x48] sm:$0xff]
    %v2311 = vld [vmem:[#allocation26 + $0x50] sm:$0xff]
    %v2312 = vld [vmem:[#allocation26 + $0x58] sm:$0xff]
    %v2313 = vld [vmem:[#allocation26 + $0x60] sm:$0xff]
    %v2314 = vld [vmem:[#allocation26 + $0x68] sm:$0xff]
    %v2315 = vld [vmem:[#allocation26 + $0x70] sm:$0xff]
    %v2316 = vld [vmem:[#allocation26 + $0x78] sm:$0xff]
    %v2317 = vld [vmem:[#allocation27] sm:$0xff]
    %v2318 = vld [vmem:[#allocation27 + $0x8] sm:$0xff]
    %v2319 = vld [vmem:[#allocation27 + $0x10] sm:$0xff]
    %v2320 = vld [vmem:[#allocation27 + $0x18] sm:$0xff]
    %v2321 = vld [vmem:[#allocation27 + $0x20] sm:$0xff]
    %v2322 = vld [vmem:[#allocation27 + $0x28] sm:$0xff]
    %v2323 = vld [vmem:[#allocation27 + $0x30] sm:$0xff]
    %v2324 = vld [vmem:[#allocation27 + $0x38] sm:$0xff]
    %v2325 = vld [vmem:[#allocation27 + $0x40] sm:$0xff]
    %v2326 = vld [vmem:[#allocation27 + $0x48] sm:$0xff]
    %v2327 = vld [vmem:[#allocation27 + $0x50] sm:$0xff]
    %v2328 = vld [vmem:[#allocation27 + $0x58] sm:$0xff]
    %v2329 = vld [vmem:[#allocation27 + $0x60] sm:$0xff]
    %v2330 = vld [vmem:[#allocation27 + $0x68] sm:$0xff]
    %v2331 = vld [vmem:[#allocation27 + $0x70] sm:$0xff]
    %v2332 = vld [vmem:[#allocation27 + $0x78] sm:$0xff]
    %v2333 = vld [vmem:[#allocation27 + $0x80] sm:$0xff]
    %v2334 = vld [vmem:[#allocation27 + $0x88] sm:$0xff]
    %v2335 = vld [vmem:[#allocation27 + $0x90] sm:$0xff]
    %v2336 = vld [vmem:[#allocation27 + $0x98] sm:$0xff]
    %v2337 = vld [vmem:[#allocation27 + $0xa0] sm:$0xff]
    %v2338 = vld [vmem:[#allocation27 + $0xa8] sm:$0xff]
    %v2339 = vld [vmem:[#allocation27 + $0xb0] sm:$0xff]
    %v2340 = vld [vmem:[#allocation27 + $0xb8] sm:$0xff]
    %v2341 = vld [vmem:[#allocation27 + $0xc0] sm:$0xff]
    %v2342 = vld [vmem:[#allocation27 + $0xc8] sm:$0xff]
    %v2343 = vld [vmem:[#allocation27 + $0xd0] sm:$0xff]
    %v2344 = vld [vmem:[#allocation27 + $0xd8] sm:$0xff]
    %v2345 = vld [vmem:[#allocation27 + $0xe0] sm:$0xff]
    %v2346 = vld [vmem:[#allocation27 + $0xe8] sm:$0xff]
    %v2347 = vld [vmem:[#allocation27 + $0xf0] sm:$0xff]
    %v2348 = vld [vmem:[#allocation27 + $0xf8] sm:$0xff]
    %v2365 = vunpack.c.l.b16 %v2301
    %v2366 = vunpack.c.h.b16 %v2301
    %v2367 = vunpack.c.l.b16 %v2302
    %v2368 = vunpack.c.h.b16 %v2302
    %v2369 = vunpack.c.l.b16 %v2303
    %v2370 = vunpack.c.h.b16 %v2303
    %v2371 = vunpack.c.l.b16 %v2304
    %v2372 = vunpack.c.h.b16 %v2304
    %v2373 = vunpack.c.l.b16 %v2305
    %v2374 = vunpack.c.h.b16 %v2305
    %v2375 = vunpack.c.l.b16 %v2306
    %v2376 = vunpack.c.h.b16 %v2306
    %v2377 = vunpack.c.l.b16 %v2307
    %v2378 = vunpack.c.h.b16 %v2307
    %v2379 = vunpack.c.l.b16 %v2308
    %v2380 = vunpack.c.h.b16 %v2308
    %v2381 = vunpack.c.l.b16 %v2309
    %v2382 = vunpack.c.h.b16 %v2309
    %v2383 = vunpack.c.l.b16 %v2310
    %v2384 = vunpack.c.h.b16 %v2310
    %v2385 = vunpack.c.l.b16 %v2311
    %v2386 = vunpack.c.h.b16 %v2311
    %v2387 = vunpack.c.l.b16 %v2312
    %v2388 = vunpack.c.h.b16 %v2312
    %v2389 = vunpack.c.l.b16 %v2313
    %v2390 = vunpack.c.h.b16 %v2313
    %v2391 = vunpack.c.l.b16 %v2314
    %v2392 = vunpack.c.h.b16 %v2314
    %v2393 = vunpack.c.l.b16 %v2315
    %v2394 = vunpack.c.h.b16 %v2315
    %v2395 = vunpack.c.l.b16 %v2316
    %v2396 = vunpack.c.h.b16 %v2316
    %v2397 = vpack.c.b16 %v2367, %v2365
    %v2398 = vpack.c.b16 %v2368, %v2366
    %v2399 = vpack.c.b16 %v2371, %v2369
    %v2400 = vpack.c.b16 %v2372, %v2370
    %v2401 = vpack.c.b16 %v2375, %v2373
    %v2402 = vpack.c.b16 %v2376, %v2374
    %v2403 = vpack.c.b16 %v2379, %v2377
    %v2404 = vpack.c.b16 %v2380, %v2378
    %v2405 = vpack.c.b16 %v2383, %v2381
    %v2406 = vpack.c.b16 %v2384, %v2382
    %v2407 = vpack.c.b16 %v2387, %v2385
    %v2408 = vpack.c.b16 %v2388, %v2386
    %v2409 = vpack.c.b16 %v2391, %v2389
    %v2410 = vpack.c.b16 %v2392, %v2390
    %v2411 = vpack.c.b16 %v2395, %v2393
    %v2412 = vpack.c.b16 %v2396, %v2394
    %v2461 = vunpack.c.l.b16 %v2317
    %v2462 = vunpack.c.h.b16 %v2317
    %v2463 = vunpack.c.l.b16 %v2318
    %v2464 = vunpack.c.h.b16 %v2318
    %v2465 = vunpack.c.l.b16 %v2319
    %v2466 = vunpack.c.h.b16 %v2319
    %v2467 = vunpack.c.l.b16 %v2320
    %v2468 = vunpack.c.h.b16 %v2320
    %v2469 = vunpack.c.l.b16 %v2321
    %v2470 = vunpack.c.h.b16 %v2321
    %v2471 = vunpack.c.l.b16 %v2322
    %v2472 = vunpack.c.h.b16 %v2322
    %v2473 = vunpack.c.l.b16 %v2323
    %v2474 = vunpack.c.h.b16 %v2323
    %v2475 = vunpack.c.l.b16 %v2324
    %v2476 = vunpack.c.h.b16 %v2324
    %v2477 = vunpack.c.l.b16 %v2325
    %v2478 = vunpack.c.h.b16 %v2325
    %v2479 = vunpack.c.l.b16 %v2326
    %v2480 = vunpack.c.h.b16 %v2326
    %v2481 = vunpack.c.l.b16 %v2327
    %v2482 = vunpack.c.h.b16 %v2327
    %v2483 = vunpack.c.l.b16 %v2328
    %v2484 = vunpack.c.h.b16 %v2328
    %v2485 = vunpack.c.l.b16 %v2329
    %v2486 = vunpack.c.h.b16 %v2329
    %v2487 = vunpack.c.l.b16 %v2330
    %v2488 = vunpack.c.h.b16 %v2330
    %v2489 = vunpack.c.l.b16 %v2331
    %v2490 = vunpack.c.h.b16 %v2331
    %v2491 = vunpack.c.l.b16 %v2332
    %v2492 = vunpack.c.h.b16 %v2332
    %v2493 = vunpack.c.l.b16 %v2333
    %v2494 = vunpack.c.h.b16 %v2333
    %v2495 = vunpack.c.l.b16 %v2334
    %v2496 = vunpack.c.h.b16 %v2334
    %v2497 = vunpack.c.l.b16 %v2335
    %v2498 = vunpack.c.h.b16 %v2335
    %v2499 = vunpack.c.l.b16 %v2336
    %v2500 = vunpack.c.h.b16 %v2336
    %v2501 = vunpack.c.l.b16 %v2337
    %v2502 = vunpack.c.h.b16 %v2337
    %v2503 = vunpack.c.l.b16 %v2338
    %v2504 = vunpack.c.h.b16 %v2338
    %v2505 = vunpack.c.l.b16 %v2339
    %v2506 = vunpack.c.h.b16 %v2339
    %v2507 = vunpack.c.l.b16 %v2340
    %v2508 = vunpack.c.h.b16 %v2340
    %v2509 = vunpack.c.l.b16 %v2341
    %v2510 = vunpack.c.h.b16 %v2341
    %v2511 = vunpack.c.l.b16 %v2342
    %v2512 = vunpack.c.h.b16 %v2342
    %v2513 = vunpack.c.l.b16 %v2343
    %v2514 = vunpack.c.h.b16 %v2343
    %v2515 = vunpack.c.l.b16 %v2344
    %v2516 = vunpack.c.h.b16 %v2344
    %v2517 = vunpack.c.l.b16 %v2345
    %v2518 = vunpack.c.h.b16 %v2345
    %v2519 = vunpack.c.l.b16 %v2346
    %v2520 = vunpack.c.h.b16 %v2346
    %v2521 = vunpack.c.l.b16 %v2347
    %v2522 = vunpack.c.h.b16 %v2347
    %v2523 = vunpack.c.l.b16 %v2348
    %v2524 = vunpack.c.h.b16 %v2348
    %v2525 = vpack.c.b16 %v2463, %v2461
    %v2526 = vpack.c.b16 %v2464, %v2462
    %v2527 = vpack.c.b16 %v2467, %v2465
    %v2528 = vpack.c.b16 %v2468, %v2466
    %v2529 = vpack.c.b16 %v2471, %v2469
    %v2530 = vpack.c.b16 %v2472, %v2470
    %v2531 = vpack.c.b16 %v2475, %v2473
    %v2532 = vpack.c.b16 %v2476, %v2474
    %v2533 = vpack.c.b16 %v2479, %v2477
    %v2534 = vpack.c.b16 %v2480, %v2478
    %v2535 = vpack.c.b16 %v2483, %v2481
    %v2536 = vpack.c.b16 %v2484, %v2482
    %v2537 = vpack.c.b16 %v2487, %v2485
    %v2538 = vpack.c.b16 %v2488, %v2486
    %v2539 = vpack.c.b16 %v2491, %v2489
    %v2540 = vpack.c.b16 %v2492, %v2490
    %v2541 = vpack.c.b16 %v2495, %v2493
    %v2542 = vpack.c.b16 %v2496, %v2494
    %v2543 = vpack.c.b16 %v2499, %v2497
    %v2544 = vpack.c.b16 %v2500, %v2498
    %v2545 = vpack.c.b16 %v2503, %v2501
    %v2546 = vpack.c.b16 %v2504, %v2502
    %v2547 = vpack.c.b16 %v2507, %v2505
    %v2548 = vpack.c.b16 %v2508, %v2506
    %v2549 = vpack.c.b16 %v2511, %v2509
    %v2550 = vpack.c.b16 %v2512, %v2510
    %v2551 = vpack.c.b16 %v2515, %v2513
    %v2552 = vpack.c.b16 %v2516, %v2514
    %v2553 = vpack.c.b16 %v2519, %v2517
    %v2554 = vpack.c.b16 %v2520, %v2518
    %v2555 = vpack.c.b16 %v2523, %v2521
    %v2556 = vpack.c.b16 %v2524, %v2522
    %2589 = vmatprep.subr.bf16.mxu0 %v2540
    %2590 = vmatpush1.bf16.msra.mxu0 %v2539
    %2591 = vmatprep.subr.bf16.mxu0 %v2538
    %2592 = vmatpush1.bf16.msra.mxu0 %v2537
    %2593 = vmatprep.subr.bf16.mxu0 %v2536
    %2594 = vmatpush1.bf16.msra.mxu0 %v2535
    %2595 = vmatprep.subr.bf16.mxu0 %v2534
    %2596 = vmatpush1.bf16.msra.mxu0 %v2533
    %2597 = vmatprep.subr.bf16.mxu0 %v2532
    %2598 = vmatpush1.bf16.msra.mxu0 %v2531
    %2599 = vmatprep.subr.bf16.mxu0 %v2530
    %2600 = vmatpush1.bf16.msra.mxu0 %v2529
    %2601 = vmatprep.subr.bf16.mxu0 %v2528
    %2602 = vmatpush1.bf16.msra.mxu0 %v2527
    %2603 = vmatprep.subr.bf16.mxu0 %v2526
    %2604 = vmatpush1.bf16.msra.mxu0 %v2525
    %2605 = vmatprep.subr.bf16.mxu0 %v2556
    %2606 = vmatpush2.bf16.msra.mxu0 %v2555
    %2607 = vmatprep.subr.bf16.mxu0 %v2554
    %2608 = vmatpush2.bf16.msra.mxu0 %v2553
    %2609 = vmatprep.subr.bf16.mxu0 %v2552
    %2610 = vmatpush2.bf16.msra.mxu0 %v2551
    %2611 = vmatprep.subr.bf16.mxu0 %v2550
    %2612 = vmatpush2.bf16.msra.mxu0 %v2549
    %2613 = vmatprep.subr.bf16.mxu0 %v2548
    %2614 = vmatpush2.bf16.msra.mxu0 %v2547
    %2615 = vmatprep.subr.bf16.mxu0 %v2546
    %2616 = vmatpush2.bf16.msra.mxu0 %v2545
    %2617 = vmatprep.subr.bf16.mxu0 %v2544
    %2618 = vmatpush2.bf16.msra.mxu0 %v2543
    %2619 = vmatprep.subr.bf16.mxu0 %v2542
    %2620 = vmatpush2.bf16.msra.mxu0 %v2541
    %2621 = vmatprep.mubr.bf16.mxu0 %v2398
    %2622 = vmatmul.mubr.bf16.gmra.mxu0 %v2397
    %v2623 = vpop.f32.mrf.mxu0
    %v2624 = vadd.f32 0.0, %v2623
    %v2625 = vpop.f32.mrf.mxu0
    %v2626 = vadd.f32 0.0, %v2625
    %v2627 = vpop.f32.mrf.mxu0
    %v2628 = vadd.f32 0.0, %v2627
    %v2629 = vpop.f32.mrf.mxu0
    %v2630 = vadd.f32 0.0, %v2629
    %2631 = vmatprep.mubr.bf16.mxu0 %v2400
    %2632 = vmatmul.mubr.bf16.gmra.mxu0 %v2399
    %v2633 = vpop.f32.mrf.mxu0
    %v2634 = vadd.f32 0.0, %v2633
    %v2635 = vpop.f32.mrf.mxu0
    %v2636 = vadd.f32 0.0, %v2635
    %v2637 = vpop.f32.mrf.mxu0
    %v2638 = vadd.f32 0.0, %v2637
    %v2639 = vpop.f32.mrf.mxu0
    %v2640 = vadd.f32 0.0, %v2639
    %2641 = vmatprep.mubr.bf16.mxu0 %v2402
    %2642 = vmatmul.mubr.bf16.gmra.mxu0 %v2401
    %v2643 = vpop.f32.mrf.mxu0
    %v2644 = vadd.f32 0.0, %v2643
    %v2645 = vpop.f32.mrf.mxu0
    %v2646 = vadd.f32 0.0, %v2645
    %v2647 = vpop.f32.mrf.mxu0
    %v2648 = vadd.f32 0.0, %v2647
    %v2649 = vpop.f32.mrf.mxu0
    %v2650 = vadd.f32 0.0, %v2649
    %2651 = vmatprep.mubr.bf16.mxu0 %v2404
    %2652 = vmatmul.mubr.bf16.gmra.mxu0 %v2403
    %v2653 = vpop.f32.mrf.mxu0
    %v2654 = vadd.f32 0.0, %v2653
    %v2655 = vpop.f32.mrf.mxu0
    %v2656 = vadd.f32 0.0, %v2655
    %v2657 = vpop.f32.mrf.mxu0
    %v2658 = vadd.f32 0.0, %v2657
    %v2659 = vpop.f32.mrf.mxu0
    %v2660 = vadd.f32 0.0, %v2659
    %2661 = vmatprep.mubr.bf16.mxu0 %v2406
    %2662 = vmatmul.mubr.bf16.gmra.mxu0 %v2405
    %v2663 = vpop.f32.mrf.mxu0
    %v2664 = vadd.f32 0.0, %v2663
    %v2665 = vpop.f32.mrf.mxu0
    %v2666 = vadd.f32 0.0, %v2665
    %v2667 = vpop.f32.mrf.mxu0
    %v2668 = vadd.f32 0.0, %v2667
    %v2669 = vpop.f32.mrf.mxu0
    %v2670 = vadd.f32 0.0, %v2669
    %2671 = vmatprep.mubr.bf16.mxu0 %v2408
    %2672 = vmatmul.mubr.bf16.gmra.mxu0 %v2407
    %v2673 = vpop.f32.mrf.mxu0
    %v2674 = vadd.f32 0.0, %v2673
    %v2675 = vpop.f32.mrf.mxu0
    %v2676 = vadd.f32 0.0, %v2675
    %v2677 = vpop.f32.mrf.mxu0
    %v2678 = vadd.f32 0.0, %v2677
    %v2679 = vpop.f32.mrf.mxu0
    %v2680 = vadd.f32 0.0, %v2679
    %2681 = vmatprep.mubr.bf16.mxu0 %v2410
    %2682 = vmatmul.mubr.bf16.gmra.mxu0 %v2409
    %v2683 = vpop.f32.mrf.mxu0
    %v2684 = vadd.f32 0.0, %v2683
    %v2685 = vpop.f32.mrf.mxu0
    %v2686 = vadd.f32 0.0, %v2685
    %v2687 = vpop.f32.mrf.mxu0
    %v2688 = vadd.f32 0.0, %v2687
    %v2689 = vpop.f32.mrf.mxu0
    %v2690 = vadd.f32 0.0, %v2689
    %2691 = vmatprep.mubr.bf16.mxu0 %v2412
    %2692 = vmatmul.mubr.bf16.gmra.mxu0 %v2411
    %v2693 = vpop.f32.mrf.mxu0
    %v2694 = vadd.f32 0.0, %v2693
    %v2695 = vpop.f32.mrf.mxu0
    %v2696 = vadd.f32 0.0, %v2695
    %v2697 = vpop.f32.mrf.mxu0
    %v2698 = vadd.f32 0.0, %v2697
    %v2699 = vpop.f32.mrf.mxu0
    %v2700 = vadd.f32 0.0, %v2699
    %2701 = vdwg.mxu0
    %v2718 = vunpack.c.l.b16 %v2269
    %v2719 = vunpack.c.l.b16 %v2270
    %v2720 = vunpack.c.l.b16 %v2271
    %v2721 = vunpack.c.l.b16 %v2272
    %v2722 = vunpack.c.l.b16 %v2273
    %v2723 = vunpack.c.l.b16 %v2274
    %v2724 = vunpack.c.l.b16 %v2275
    %v2725 = vunpack.c.l.b16 %v2276
    %v2726 = vunpack.c.l.b16 %v2277
    %v2727 = vunpack.c.l.b16 %v2278
    %v2728 = vunpack.c.l.b16 %v2279
    %v2729 = vunpack.c.l.b16 %v2280
    %v2730 = vunpack.c.l.b16 %v2281
    %v2731 = vunpack.c.l.b16 %v2282
    %v2732 = vunpack.c.l.b16 %v2283
    %v2733 = vunpack.c.l.b16 %v2284
    %v2734 = vpack.c.b16 %v2719, %v2718
    %v2735 = vpack.c.b16 %v2721, %v2720
    %v2736 = vpack.c.b16 %v2723, %v2722
    %v2737 = vpack.c.b16 %v2725, %v2724
    %v2738 = vpack.c.b16 %v2727, %v2726
    %v2739 = vpack.c.b16 %v2729, %v2728
    %v2740 = vpack.c.b16 %v2731, %v2730
    %v2741 = vpack.c.b16 %v2733, %v2732
    %v2766 = vunpack.c.l.b16 %v2285
    %v2767 = vunpack.c.h.b16 %v2285
    %v2768 = vunpack.c.l.b16 %v2286
    %v2769 = vunpack.c.h.b16 %v2286
    %v2770 = vunpack.c.l.b16 %v2287
    %v2771 = vunpack.c.h.b16 %v2287
    %v2772 = vunpack.c.l.b16 %v2288
    %v2773 = vunpack.c.h.b16 %v2288
    %v2774 = vunpack.c.l.b16 %v2289
    %v2775 = vunpack.c.h.b16 %v2289
    %v2776 = vunpack.c.l.b16 %v2290
    %v2777 = vunpack.c.h.b16 %v2290
    %v2778 = vunpack.c.l.b16 %v2291
    %v2779 = vunpack.c.h.b16 %v2291
    %v2780 = vunpack.c.l.b16 %v2292
    %v2781 = vunpack.c.h.b16 %v2292
    %v2782 = vunpack.c.l.b16 %v2293
    %v2783 = vunpack.c.h.b16 %v2293
    %v2784 = vunpack.c.l.b16 %v2294
    %v2785 = vunpack.c.h.b16 %v2294
    %v2786 = vunpack.c.l.b16 %v2295
    %v2787 = vunpack.c.h.b16 %v2295
    %v2788 = vunpack.c.l.b16 %v2296
    %v2789 = vunpack.c.h.b16 %v2296
    %v2790 = vunpack.c.l.b16 %v2297
    %v2791 = vunpack.c.h.b16 %v2297
    %v2792 = vunpack.c.l.b16 %v2298
    %v2793 = vunpack.c.h.b16 %v2298
    %v2794 = vunpack.c.l.b16 %v2299
    %v2795 = vunpack.c.h.b16 %v2299
    %v2796 = vunpack.c.l.b16 %v2300
    %v2797 = vunpack.c.h.b16 %v2300
    %v2798 = vpack.c.b16 %v2768, %v2766
    %v2799 = vpack.c.b16 %v2769, %v2767
    %v2800 = vpack.c.b16 %v2772, %v2770
    %v2801 = vpack.c.b16 %v2773, %v2771
    %v2802 = vpack.c.b16 %v2776, %v2774
    %v2803 = vpack.c.b16 %v2777, %v2775
    %v2804 = vpack.c.b16 %v2780, %v2778
    %v2805 = vpack.c.b16 %v2781, %v2779
    %v2806 = vpack.c.b16 %v2784, %v2782
    %v2807 = vpack.c.b16 %v2785, %v2783
    %v2808 = vpack.c.b16 %v2788, %v2786
    %v2809 = vpack.c.b16 %v2789, %v2787
    %v2810 = vpack.c.b16 %v2792, %v2790
    %v2811 = vpack.c.b16 %v2793, %v2791
    %v2812 = vpack.c.b16 %v2796, %v2794
    %v2813 = vpack.c.b16 %v2797, %v2795
    %2830 = vmatprep.subr.bf16.mxu0 %v2813
    %2831 = vmatpush1.bf16.msra.mxu0 %v2812
    %2832 = vmatprep.subr.bf16.mxu0 %v2811
    %2833 = vmatpush1.bf16.msra.mxu0 %v2810
    %2834 = vmatprep.subr.bf16.mxu0 %v2809
    %2835 = vmatpush1.bf16.msra.mxu0 %v2808
    %2836 = vmatprep.subr.bf16.mxu0 %v2807
    %2837 = vmatpush1.bf16.msra.mxu0 %v2806
    %2838 = vmatprep.subr.bf16.mxu0 %v2805
    %2839 = vmatpush1.bf16.msra.mxu0 %v2804
    %2840 = vmatprep.subr.bf16.mxu0 %v2803
    %2841 = vmatpush1.bf16.msra.mxu0 %v2802
    %2842 = vmatprep.subr.bf16.mxu0 %v2801
    %2843 = vmatpush1.bf16.msra.mxu0 %v2800
    %2844 = vmatprep.subr.bf16.mxu0 %v2799
    %2845 = vmatpush1.bf16.msra.mxu0 %v2798
    %2846 = vmatprep.subr.bf16.mxu0 0
    %2847 = vmatpush2.bf16.msra.mxu0 0
    %2848 = vmatprep.subr.bf16.mxu0 0
    %2849 = vmatpush2.bf16.msra.mxu0 0
    %2850 = vmatprep.subr.bf16.mxu0 0
    %2851 = vmatpush2.bf16.msra.mxu0 0
    %2852 = vmatprep.subr.bf16.mxu0 0
    %2853 = vmatpush2.bf16.msra.mxu0 0
    %2854 = vmatprep.subr.bf16.mxu0 0
    %2855 = vmatpush2.bf16.msra.mxu0 0
    %2856 = vmatprep.subr.bf16.mxu0 0
    %2857 = vmatpush2.bf16.msra.mxu0 0
    %2858 = vmatprep.subr.bf16.mxu0 0
    %2859 = vmatpush2.bf16.msra.mxu0 0
    %2860 = vmatprep.subr.bf16.mxu0 0
    %2861 = vmatpush2.bf16.msra.mxu0 0
    %2862 = vmatprep.mubr.bf16.mxu0 0
    %2863 = vmatmul.mubr.bf16.gmra.mxu0 %v2734
    %v2864 = vpop.f32.mrf.mxu0
    %v2865 = vadd.f32 %v2624, %v2864
    %v2866 = vpop.f32.mrf.mxu0
    %v2867 = vadd.f32 %v2626, %v2866
    %v2868 = vpop.f32.mrf.mxu0
    %v2869 = vadd.f32 %v2628, %v2868
    %v2870 = vpop.f32.mrf.mxu0
    %v2871 = vadd.f32 %v2630, %v2870
    %2872 = vmatprep.mubr.bf16.mxu0 0
    %2873 = vmatmul.mubr.bf16.gmra.mxu0 %v2735
    %v2874 = vpop.f32.mrf.mxu0
    %v2875 = vadd.f32 %v2634, %v2874
    %v2876 = vpop.f32.mrf.mxu0
    %v2877 = vadd.f32 %v2636, %v2876
    %v2878 = vpop.f32.mrf.mxu0
    %v2879 = vadd.f32 %v2638, %v2878
    %v2880 = vpop.f32.mrf.mxu0
    %v2881 = vadd.f32 %v2640, %v2880
    %2882 = vmatprep.mubr.bf16.mxu0 0
    %2883 = vmatmul.mubr.bf16.gmra.mxu0 %v2736
    %v2884 = vpop.f32.mrf.mxu0
    %v2885 = vadd.f32 %v2644, %v2884
    %v2886 = vpop.f32.mrf.mxu0
    %v2887 = vadd.f32 %v2646, %v2886
    %v2888 = vpop.f32.mrf.mxu0
    %v2889 = vadd.f32 %v2648, %v2888
    %v2890 = vpop.f32.mrf.mxu0
    %v2891 = vadd.f32 %v2650, %v2890
    %2892 = vmatprep.mubr.bf16.mxu0 0
    %2893 = vmatmul.mubr.bf16.gmra.mxu0 %v2737
    %v2894 = vpop.f32.mrf.mxu0
    %v2895 = vadd.f32 %v2654, %v2894
    %v2896 = vpop.f32.mrf.mxu0
    %v2897 = vadd.f32 %v2656, %v2896
    %v2898 = vpop.f32.mrf.mxu0
    %v2899 = vadd.f32 %v2658, %v2898
    %v2900 = vpop.f32.mrf.mxu0
    %v2901 = vadd.f32 %v2660, %v2900
    %2902 = vmatprep.mubr.bf16.mxu0 0
    %2903 = vmatmul.mubr.bf16.gmra.mxu0 %v2738
    %v2904 = vpop.f32.mrf.mxu0
    %v2905 = vadd.f32 %v2664, %v2904
    %v2906 = vpop.f32.mrf.mxu0
    %v2907 = vadd.f32 %v2666, %v2906
    %v2908 = vpop.f32.mrf.mxu0
    %v2909 = vadd.f32 %v2668, %v2908
    %v2910 = vpop.f32.mrf.mxu0
    %v2911 = vadd.f32 %v2670, %v2910
    %2912 = vmatprep.mubr.bf16.mxu0 0
    %2913 = vmatmul.mubr.bf16.gmra.mxu0 %v2739
    %v2914 = vpop.f32.mrf.mxu0
    %v2915 = vadd.f32 %v2674, %v2914
    %v2916 = vpop.f32.mrf.mxu0
    %v2917 = vadd.f32 %v2676, %v2916
    %v2918 = vpop.f32.mrf.mxu0
    %v2919 = vadd.f32 %v2678, %v2918
    %v2920 = vpop.f32.mrf.mxu0
    %v2921 = vadd.f32 %v2680, %v2920
    %2922 = vmatprep.mubr.bf16.mxu0 0
    %2923 = vmatmul.mubr.bf16.gmra.mxu0 %v2740
    %v2924 = vpop.f32.mrf.mxu0
    %v2925 = vadd.f32 %v2684, %v2924
    %v2926 = vpop.f32.mrf.mxu0
    %v2927 = vadd.f32 %v2686, %v2926
    %v2928 = vpop.f32.mrf.mxu0
    %v2929 = vadd.f32 %v2688, %v2928
    %v2930 = vpop.f32.mrf.mxu0
    %v2931 = vadd.f32 %v2690, %v2930
    %2932 = vmatprep.mubr.bf16.mxu0 0
    %2933 = vmatmul.mubr.bf16.gmra.mxu0 %v2741
    %v2934 = vpop.f32.mrf.mxu0
    %v2935 = vadd.f32 %v2694, %v2934
    %v2936 = vpop.f32.mrf.mxu0
    %v2937 = vadd.f32 %v2696, %v2936
    %v2938 = vpop.f32.mrf.mxu0
    %v2939 = vadd.f32 %v2698, %v2938
    %v2940 = vpop.f32.mrf.mxu0
    %v2941 = vadd.f32 %v2700, %v2940
    %2942 = vdwg.mxu0
    %v2943 = vld [vmem:[%s0] sm:$0x3]
    %v2945 = vlaneseq
    %v2946 = vshrl.u32 %v2945, 7
    %v2947 = vsub.s32 0, %v2946
    %v2948 = vrot.slane %v2943, %v2947
    %v2949 = vlaneseq
    %v2950 = vshrl.u32 %v2949, 7
    %v2951 = vsub.s32 1, %v2950
    %v2952 = vrot.slane %v2943, %v2951
    %v2955 = vadd.f32 %v2865, %v2948
    %v2956 = vadd.f32 %v2867, %v2952
    %v2957 = vadd.f32 %v2869, %v2948
    %v2958 = vadd.f32 %v2871, %v2952
    %v2959 = vadd.f32 %v2875, %v2948
    %v2960 = vadd.f32 %v2877, %v2952
    %v2961 = vadd.f32 %v2879, %v2948
    %v2962 = vadd.f32 %v2881, %v2952
    %v2963 = vadd.f32 %v2885, %v2948
    %v2964 = vadd.f32 %v2887, %v2952
    %v2965 = vadd.f32 %v2889, %v2948
    %v2966 = vadd.f32 %v2891, %v2952
    %v2967 = vadd.f32 %v2895, %v2948
    %v2968 = vadd.f32 %v2897, %v2952
    %v2969 = vadd.f32 %v2899, %v2948
    %v2970 = vadd.f32 %v2901, %v2952
    %v2971 = vadd.f32 %v2905, %v2948
    %v2972 = vadd.f32 %v2907, %v2952
    %v2973 = vadd.f32 %v2909, %v2948
    %v2974 = vadd.f32 %v2911, %v2952
    %v2975 = vadd.f32 %v2915, %v2948
    %v2976 = vadd.f32 %v2917, %v2952
    %v2977 = vadd.f32 %v2919, %v2948
    %v2978 = vadd.f32 %v2921, %v2952
    %v2979 = vadd.f32 %v2925, %v2948
    %v2980 = vadd.f32 %v2927, %v2952
    %v2981 = vadd.f32 %v2929, %v2948
    %v2982 = vadd.f32 %v2931, %v2952
    %v2983 = vadd.f32 %v2935, %v2948
    %v2984 = vadd.f32 %v2937, %v2952
    %v2985 = vadd.f32 %v2939, %v2948
    %v2986 = vadd.f32 %v2941, %v2952
    %2987 = vst [vmem:[#allocation22] sm:$0xff] %v2955
    %2988 = vst [vmem:[#allocation22 + $0x8] sm:$0xff] %v2956
    %2989 = vst [vmem:[#allocation22 + $0x10] sm:$0xff] %v2957
    %2990 = vst [vmem:[#allocation22 + $0x18] sm:$0xff] %v2958
    %2991 = vst [vmem:[#allocation22 + $0x20] sm:$0xff] %v2959
    %2992 = vst [vmem:[#allocation22 + $0x28] sm:$0xff] %v2960
    %2993 = vst [vmem:[#allocation22 + $0x30] sm:$0xff] %v2961
    %2994 = vst [vmem:[#allocation22 + $0x38] sm:$0xff] %v2962
    %2995 = vst [vmem:[#allocation22 + $0x40] sm:$0xff] %v2963
    %2996 = vst [vmem:[#allocation22 + $0x48] sm:$0xff] %v2964
    %2997 = vst [vmem:[#allocation22 + $0x50] sm:$0xff] %v2965
    %2998 = vst [vmem:[#allocation22 + $0x58] sm:$0xff] %v2966
    %2999 = vst [vmem:[#allocation22 + $0x60] sm:$0xff] %v2967
    %3000 = vst [vmem:[#allocation22 + $0x68] sm:$0xff] %v2968
    %3001 = vst [vmem:[#allocation22 + $0x70] sm:$0xff] %v2969
    %3002 = vst [vmem:[#allocation22 + $0x78] sm:$0xff] %v2970
    %3003 = vst [vmem:[#allocation22 + $0x80] sm:$0xff] %v2971
    %3004 = vst [vmem:[#allocation22 + $0x88] sm:$0xff] %v2972
    %3005 = vst [vmem:[#allocation22 + $0x90] sm:$0xff] %v2973
    %3006 = vst [vmem:[#allocation22 + $0x98] sm:$0xff] %v2974
    %3007 = vst [vmem:[#allocation22 + $0xa0] sm:$0xff] %v2975
    %3008 = vst [vmem:[#allocation22 + $0xa8] sm:$0xff] %v2976
    %3009 = vst [vmem:[#allocation22 + $0xb0] sm:$0xff] %v2977
    %3010 = vst [vmem:[#allocation22 + $0xb8] sm:$0xff] %v2978
    %3011 = vst [vmem:[#allocation22 + $0xc0] sm:$0xff] %v2979
    %3012 = vst [vmem:[#allocation22 + $0xc8] sm:$0xff] %v2980
    %3013 = vst [vmem:[#allocation22 + $0xd0] sm:$0xff] %v2981
    %3014 = vst [vmem:[#allocation22 + $0xd8] sm:$0xff] %v2982
    %3015 = vst [vmem:[#allocation22 + $0xe0] sm:$0xff] %v2983
    %3016 = vst [vmem:[#allocation22 + $0xe8] sm:$0xff] %v2984
    %3017 = vst [vmem:[#allocation22 + $0xf0] sm:$0xff] %v2985
    %3018 = vst [vmem:[#allocation22 + $0xf8] sm:$0xff] %v2986
    // Predicated region
    $region26: #{cat_module_forward.2} parent=1 // pred_check
      _
    $region27: #{cat_module_forward.2} parent=1 // pred_check_branch
      %3020 = sbr.rel (0) target = $region29
    $region28: #{cat_module_forward.2} parent=1 // pred_region
      %s3022 = ssub.s32 4096, 4096
      %3023 = vsyncadd [#allocation23], %s3022
      %s3024 = sshll.u32 [#allocation22], 4
      %s3025 = int_to_ptr.vmem [resolvable:$true] %s3024
      %3030 = dma.vmem_to_hbm [thread:$0]  %s3025, 4096, %s7, [#allocation23], 256, 256, 16
    $region29: #{cat_module_forward.2} parent=1 // pred_fallthru
      _
    // Predicated region
    $region30: #{cat_module_forward.2} parent=1 // pred_check
      _
    $region31: #{cat_module_forward.2} parent=1 // pred_check_branch
      %3032 = sbr.rel (0) target = $region33
    $region32: #{cat_module_forward.2} parent=1 // pred_region
      %3033 = dma.done [#allocation23], 4096
    $region33: #{cat_module_forward.2} parent=1 // pred_fallthru
      _
    %3034 = vsyncpa [#allocation23], 1

</llo_original>
